<compile_context>
chip_gen: v6e
topology: v6e:2x2x1
jax: 0.10.0
libtpu: 0.0.40
codegen_flags: <defaults>
</compile_context>

<pallas_src>
import jax
import jax.numpy as jnp
from jax.experimental import pallas as pl
from jax.experimental.pallas import tpu as pltpu

H = 1024          # roberta-large hidden size (dense is Linear(1024, 1024))
NUM_OUT = 14      # out_proj is Linear(1024, 14)
OUT_LANES = 128   # lane-dense padded output width (>= NUM_OUT)


def head_kernel(x_ref, w1_ref, b1_ref, w2_ref, b2_ref, out_ref, acc_ref):
    """One reduction step of: out = (tanh(x @ W1 + b1)) @ W2 + b2.

    x_ref:  (N_pad, tk)  bf16   -- gathered rows, this contraction slab
    w1_ref: (tk, H)      bf16   -- dense weight slab (streamed / pipelined)
    b1_ref: (1, H)       f32
    w2_ref: (H, 128)     bf16   -- out_proj weight, padded to 128 lanes
    b2_ref: (1, 128)     f32
    out_ref:(N_pad, 128) f32
    acc_ref:(N_pad, H)   f32    -- dense accumulator, lives across the grid
    """
    k = pl.program_id(0)

    @pl.when(k == 0)
    def _init():
        acc_ref[...] = jnp.zeros_like(acc_ref)

    # Partial dense matmul over this tk-wide slab of the contraction dim.
    acc_ref[...] += jnp.dot(x_ref[...], w1_ref[...],
                            preferred_element_type=jnp.float32)

    @pl.when(k == pl.num_programs(0) - 1)
    def _finalize():
        # dropout(p=0.1) is identity in eval mode.
        h = jnp.tanh(acc_ref[...] + b1_ref[...])
        out = jnp.dot(h.astype(jnp.bfloat16), w2_ref[...],
                      preferred_element_type=jnp.float32)
        out_ref[...] = (out + b2_ref[...]).astype(out_ref.dtype)


def span_head(hidden, bop_index, w_dense, b_dense, w_out, b_out, *, tk=512):
    """hidden: (B, S, H) f32, bop_index: (B, K) int32,
    w_dense: (H, H) bf16, b_dense: (1, H) f32,
    w_out: (H, NUM_OUT) bf16, b_out: (1, NUM_OUT) f32 -> (B*K, NUM_OUT) f32.

    tk is the contraction tile of the 1024x1024 dense matmul (512 -> 2 grid
    steps; 1024 -> single step, good default on v7x)."""
    B, S, Hh = hidden.shape
    _, K = bop_index.shape
    N = B * K
    N_pad = ((N + 7) // 8) * 8
    assert Hh % tk == 0 and tk % 128 == 0

    # x[b*K + j, :] = hidden[b, bop[b, j], :]
    # (== torch.cat([torch.index_select(a, 0, i) for a, i in zip(hidden, bop)]))
    # Hoisted out of the kernel per perf review: 8 rows is a trivial XLA gather
    # and lets Pallas pipeline x slabs with the dense-weight stream.
    idx = jnp.clip(bop_index.astype(jnp.int32), 0, S - 1)       # bounds-safe
    x = jnp.take_along_axis(hidden, idx[..., None], axis=1).reshape(N, Hh)
    x = jnp.pad(x, ((0, N_pad - N), (0, 0))).astype(jnp.bfloat16)

    # Pad out_proj to a lane-dense 128-wide tile (unmasked vst, clean output DMA).
    w_out_p = jnp.pad(w_out, ((0, 0), (0, OUT_LANES - w_out.shape[1])))
    b_out_p = jnp.pad(b_out, ((0, 0), (0, OUT_LANES - b_out.shape[1])))

    out_p = pl.pallas_call(
        head_kernel,
        out_shape=jax.ShapeDtypeStruct((N_pad, OUT_LANES), jnp.float32),
        grid_spec=pltpu.PrefetchScalarGridSpec(
            num_scalar_prefetch=0,
            grid=(Hh // tk,),                                      # dense contraction
            in_specs=[
                pl.BlockSpec((N_pad, tk), lambda k: (0, k)),       # x slab (bf16)
                pl.BlockSpec((tk, Hh), lambda k: (k, 0)),          # dense W slab
                pl.BlockSpec((1, Hh), lambda k: (0, 0)),           # dense b
                pl.BlockSpec((Hh, OUT_LANES), lambda k: (0, 0)),   # out_proj W
                pl.BlockSpec((1, OUT_LANES), lambda k: (0, 0)),    # out_proj b
            ],
            out_specs=pl.BlockSpec((N_pad, OUT_LANES), lambda k: (0, 0)),
            scratch_shapes=[
                pltpu.VMEM((N_pad, Hh), jnp.float32),   # dense f32 accumulator
            ],
        ),
        compiler_params=pltpu.CompilerParams(
            dimension_semantics=("arbitrary",),          # reduction axis
        ),
    )(x, w_dense, b_dense, w_out_p, b_out_p)

    return out_p[:N, :w_out.shape[1]]


if __name__ == "__main__":
    key = jax.random.PRNGKey(0)
    B, S, K = 2, 16, 4          # batch, sequence length, bop indices per example
    VOCAB = 128                 # synthetic small vocab (real model resizes to 50267)
    k_emb, k_ids, k_bop, kd_w, kd_b, ko_w, ko_b = jax.random.split(key, 7)

    ids = jax.random.randint(k_ids, (B, S), 0, VOCAB)
    mask = jnp.ones((B, S), dtype=jnp.float32)
    bop_index = jax.random.randint(k_bop, (B, K), 0, S).astype(jnp.int32)

    # Synthetic stand-in for roberta(ids, mask).last_hidden_state  (B, S, 1024).
    emb_table = jax.random.normal(k_emb, (VOCAB, H), dtype=jnp.float32) * 0.02
    hidden = emb_table[ids] * mask[..., None]

    # Head parameters: weights stored/streamed as bf16 (mem-bound kernel),
    # biases f32.  Stored as (in, out); same math as torch Linear x @ W.T + b.
    w_dense = (jax.random.normal(kd_w, (H, H), jnp.float32) * 0.02).astype(jnp.bfloat16)
    b_dense = jax.random.normal(kd_b, (1, H), jnp.float32) * 0.02
    w_out = (jax.random.normal(ko_w, (H, NUM_OUT), jnp.float32) * 0.02).astype(jnp.bfloat16)
    b_out = jax.random.normal(ko_b, (1, NUM_OUT), jnp.float32) * 0.02

    out = span_head(hidden, bop_index, w_dense, b_dense, w_out, b_out, tk=512)
    out = jax.block_until_ready(out)
    assert out.shape == (B * K, NUM_OUT), out.shape

    # Pure-JAX reference with matching numerics (bf16 weights / bf16 MXU inputs,
    # f32 accumulation).
    x_ref = jnp.concatenate([hidden[b][bop_index[b]] for b in range(B)], axis=0)
    h_ref = jnp.tanh(
        jnp.dot(x_ref.astype(jnp.bfloat16), w_dense,
                preferred_element_type=jnp.float32) + b_dense)
    ref = jnp.dot(h_ref.astype(jnp.bfloat16), w_out,
                  preferred_element_type=jnp.float32) + b_out
    assert jnp.allclose(out, ref, atol=5e-4, rtol=5e-4), \
        float(jnp.max(jnp.abs(out - ref)))

    print("KERNEL_OK")
</pallas_src>

<mosaic_0001>
module attributes {stable_mosaic.version = 11 : i64} {
  func.func @head_kernel(%arg0: i32, %arg1: memref<8x512xbf16, #tpu.memory_space<vmem>>, %arg2: memref<512x1024xbf16, #tpu.memory_space<vmem>>, %arg3: memref<1x1024xf32, #tpu.memory_space<vmem>>, %arg4: memref<1024x128xbf16, #tpu.memory_space<vmem>>, %arg5: memref<1x128xf32, #tpu.memory_space<vmem>>, %arg6: memref<8x128xf32, #tpu.memory_space<vmem>>, %arg7: memref<8x1024xf32, #tpu.memory_space<vmem>>) attributes {dimension_semantics = [#tpu.dimension_semantics<arbitrary>], iteration_bounds = array<i64: 2>, scalar_prefetch = 0 : i64, scratch_operands = 1 : i64, tpu.core_type = #tpu.core_type<tc>, window_params = [{transform_indices = @transform_0, window_bounds = array<i64: 8, 512>}, {transform_indices = @transform_1, window_bounds = array<i64: 512, 1024>}, {pipeline_mode = #tpu.pipeline_mode<synchronous>, transform_indices = @transform_2, window_bounds = array<i64: 1, 1024>}, {pipeline_mode = #tpu.pipeline_mode<synchronous>, transform_indices = @transform_3, window_bounds = array<i64: 1024, 128>}, {pipeline_mode = #tpu.pipeline_mode<synchronous>, transform_indices = @transform_4, window_bounds = array<i64: 1, 128>}, {pipeline_mode = #tpu.pipeline_mode<synchronous>, transform_indices = @transform_5, window_bounds = array<i64: 8, 128>}]} {
    %c0_i32 = arith.constant 0 : i32
    %0 = arith.cmpi eq, %arg0, %c0_i32 : i32
    %1 = arith.extui %0 : i1 to i32
    %c0_i32_0 = arith.constant 0 : i32
    %2 = arith.cmpi ne, %1, %c0_i32_0 : i32
    scf.if %2 {
      %cst_9 = arith.constant 0.000000e+00 : f32
      %12 = vector.broadcast %cst_9 : f32 to vector<8x1024xf32>
      %c0_10 = arith.constant 0 : index
      %c0_11 = arith.constant 0 : index
      %13 = vector.load %arg7[%c0_10, %c0_11] : memref<8x1024xf32, #tpu.memory_space<vmem>>, vector<8x1024xf32>
      tpu.vector_store %arg7[%c0_10, %c0_11], %12 {strides = array<i32>} : memref<8x1024xf32, #tpu.memory_space<vmem>>, vector<8x1024xf32>,
    } else {
    }
    %c0 = arith.constant 0 : index
    %c0_1 = arith.constant 0 : index
    %3 = vector.load %arg7[%c0, %c0_1] : memref<8x1024xf32, #tpu.memory_space<vmem>>, vector<8x1024xf32>
    %c0_2 = arith.constant 0 : index
    %c0_3 = arith.constant 0 : index
    %4 = vector.load %arg1[%c0_2, %c0_3] : memref<8x512xbf16, #tpu.memory_space<vmem>>, vector<8x512xbf16>
    %c0_4 = arith.constant 0 : index
    %c0_5 = arith.constant 0 : index
    %5 = vector.load %arg2[%c0_4, %c0_5] : memref<512x1024xbf16, #tpu.memory_space<vmem>>, vector<512x1024xbf16>
    %cst = arith.constant dense<0.000000e+00> : vector<8x1024xf32>
    %6 = tpu.matmul %4, %5, %cst {dimension_numbers = #tpu.dot_dimension_numbers<[1], [0], [0], [1], [0, 0, 1, 1], [], []>} : vector<8x512xbf16>, vector<512x1024xbf16>, vector<8x1024xf32> -> vector<8x1024xf32>
    %7 = arith.addf %3, %6 : vector<8x1024xf32>
    %c0_6 = arith.constant 0 : index
    %c0_7 = arith.constant 0 : index
    %8 = vector.load %arg7[%c0_6, %c0_7] : memref<8x1024xf32, #tpu.memory_space<vmem>>, vector<8x1024xf32>
    tpu.vector_store %arg7[%c0_6, %c0_7], %7 {strides = array<i32>} : memref<8x1024xf32, #tpu.memory_space<vmem>>, vector<8x1024xf32>,
    %c1_i32 = arith.constant 1 : i32
    %9 = arith.cmpi eq, %arg0, %c1_i32 : i32
    %10 = arith.extui %9 : i1 to i32
    %c0_i32_8 = arith.constant 0 : i32
    %11 = arith.cmpi ne, %10, %c0_i32_8 : i32
    scf.if %11 {
      %c0_9 = arith.constant 0 : index
      %c0_10 = arith.constant 0 : index
      %12 = vector.load %arg7[%c0_9, %c0_10] : memref<8x1024xf32, #tpu.memory_space<vmem>>, vector<8x1024xf32>
      %c0_11 = arith.constant 0 : index
      %c0_12 = arith.constant 0 : index
      %13 = vector.load %arg3[%c0_11, %c0_12] : memref<1x1024xf32, #tpu.memory_space<vmem>>, vector<1x1024xf32>
      %14 = vector.broadcast %13 : vector<1x1024xf32> to vector<8x1024xf32>
      %15 = arith.addf %12, %14 : vector<8x1024xf32>
      %16 = math.tanh %15 : vector<8x1024xf32>
      %17 = arith.truncf %16 : vector<8x1024xf32> to vector<8x1024xbf16>
      %c0_13 = arith.constant 0 : index
      %c0_14 = arith.constant 0 : index
      %18 = vector.load %arg4[%c0_13, %c0_14] : memref<1024x128xbf16, #tpu.memory_space<vmem>>, vector<1024x128xbf16>
      %cst_15 = arith.constant dense<0.000000e+00> : vector<8x128xf32>
      %19 = tpu.matmul %17, %18, %cst_15 {dimension_numbers = #tpu.dot_dimension_numbers<[1], [0], [0], [1], [0, 0, 1, 1], [], []>} : vector<8x1024xbf16>, vector<1024x128xbf16>, vector<8x128xf32> -> vector<8x128xf32>
      %c0_16 = arith.constant 0 : index
      %c0_17 = arith.constant 0 : index
      %20 = vector.load %arg5[%c0_16, %c0_17] : memref<1x128xf32, #tpu.memory_space<vmem>>, vector<1x128xf32>
      %21 = vector.broadcast %20 : vector<1x128xf32> to vector<8x128xf32>
      %22 = arith.addf %19, %21 : vector<8x128xf32>
      %c0_18 = arith.constant 0 : index
      %c0_19 = arith.constant 0 : index
      %23 = vector.load %arg6[%c0_18, %c0_19] : memref<8x128xf32, #tpu.memory_space<vmem>>, vector<8x128xf32>
      tpu.vector_store %arg6[%c0_18, %c0_19], %22 {strides = array<i32>} : memref<8x128xf32, #tpu.memory_space<vmem>>, vector<8x128xf32>,
    } else {
    }
    return
  }
  func.func @transform_0(%arg0: i32) -> (i32, i32) {
    %c0_i32 = arith.constant 0 : i32
    %c0_i32_0 = arith.constant 0 : i32
    return %c0_i32, %arg0 : i32, i32
  }
  func.func @transform_1(%arg0: i32) -> (i32, i32) {
    %c0_i32 = arith.constant 0 : i32
    %c0_i32_0 = arith.constant 0 : i32
    return %arg0, %c0_i32 : i32, i32
  }
  func.func @transform_2(%arg0: i32) -> (i32, i32) {
    %c0_i32 = arith.constant 0 : i32
    %c0_i32_0 = arith.constant 0 : i32
    %c0_i32_1 = arith.constant 0 : i32
    return %c0_i32, %c0_i32_0 : i32, i32
  }
  func.func @transform_3(%arg0: i32) -> (i32, i32) {
    %c0_i32 = arith.constant 0 : i32
    %c0_i32_0 = arith.constant 0 : i32
    %c0_i32_1 = arith.constant 0 : i32
    return %c0_i32, %c0_i32_0 : i32, i32
  }
  func.func @transform_4(%arg0: i32) -> (i32, i32) {
    %c0_i32 = arith.constant 0 : i32
    %c0_i32_0 = arith.constant 0 : i32
    %c0_i32_1 = arith.constant 0 : i32
    return %c0_i32, %c0_i32_0 : i32, i32
  }
  func.func @transform_5(%arg0: i32) -> (i32, i32) {
    %c0_i32 = arith.constant 0 : i32
    %c0_i32_0 = arith.constant 0 : i32
    %c0_i32_1 = arith.constant 0 : i32
    return %c0_i32, %c0_i32_0 : i32, i32
  }
}

</mosaic_0001>

<llo_original>
// kernel: tpu_custom_call.1
$region0: #{tpu_custom_call.1}
  #allocation0 [shape = 'u32[]', space=smem, size = 0x4, offset = 0x4, fixed_abs, tag = 'smem constant byte address 0x4 - core index']
  #allocation1 [shape = 'u32[144,128]{1,0:T(1,128)}', space=vmem, size = 0x12000, scoped, tag = 'internal scratch']
  #allocation2 [shape = 'f32[8,1024]{1,0:T(8,128)}', space=vmem, size = 0x8000, scoped, tag = 'scratch operand']
  %s0 = inlined_call_operand.hbm [shape: bf16[8,1024], index: 0, kind: input, shape index: {}]
  %s1 = inlined_call_operand.hbm [shape: bf16[1024,1024], index: 1, kind: input, shape index: {}]
  %s2 = inlined_call_operand.hbm [shape: f32[1,1024], index: 2, kind: input, shape index: {}]
  %s3 = inlined_call_operand.hbm [shape: bf16[1024,128], index: 3, kind: input, shape index: {}]
  %s4 = inlined_call_operand.hbm [shape: f32[1,128], index: 4, kind: input, shape index: {}]
  %s5 = inlined_call_operand.hbm [shape: f32[8,128], index: 5, kind: output, shape index: {}]
  %s6 = sld [smem:[#allocation0]]
  $region81: #{tpu_custom_call.1} parent=0
    _
  %s8 = ssub.s32 1, %s6
  %s9 = scalar_select 0, %s8, %s6
  $region1: #{tpu_custom_call.1} parent=0
    #allocation3 [shape = 'u8[16384]{0}', space=vmem, size = 0x4000, scoped, tag = 'input window, operand 0']
    #allocation4 [shape = 's32[2]{0}', space=sflag, size = 0x8, scoped, tag = 'scoped memory for tpu_custom_call.1']
    #allocation5 [shape = 's32[2]{0}', space=sflag, size = 0x8, scoped, tag = 'scoped memory for tpu_custom_call.1']
    #allocation6 [shape = 'u8[2097152]{0}', space=vmem, size = 0x200000, scoped, tag = 'input window, operand 1']
    #allocation7 [shape = 's32[2]{0}', space=sflag, size = 0x8, scoped, tag = 'scoped memory for tpu_custom_call.1']
    #allocation8 [shape = 'u8[4096]{0}', space=vmem, size = 0x1000, scoped, tag = 'input window, operand 2, single buffered']
    #allocation9 [shape = 'u8[262144]{0}', space=vmem, size = 0x40000, scoped, tag = 'input window, operand 3, single buffered']
    #allocation10 [shape = 's32[1]{0}', space=sflag, size = 0x4, scoped, tag = 'scoped memory for tpu_custom_call.1']
    #allocation11 [shape = 'u8[512]{0}', space=vmem, size = 0x400, scoped, tag = 'input window, operand 4, single buffered']
    #allocation12 [shape = 'u8[4096]{0}', space=vmem, size = 0x1000, scoped, tag = 'output window, operand 0, single buffered']
    %10 = vsyncpa [#allocation4], 0
    %s11 = scalar_lea.sflag [#allocation4], 1
    %12 = vsyncpa %s11, 0
    %13 = vsyncpa [#allocation7], 0
    %s14 = scalar_lea.sflag [#allocation7], 1
    %15 = vsyncpa %s14, 0
    %16 = vsyncpa [#allocation10], 0
    %17 = vsyncpa [#allocation5], 0
    loop: start=0, step=1, limit=4
    $region2: #{tpu_custom_call.1} parent=1 // loop_pre_header
      _
    $region3: #{tpu_custom_call.1} parent=1 // loop_header
      %s19 = sphi 0, %s23
      %p20 = scmp.ge.s32.totalorder %s19, 4
      %s29 = sphi 0, %s31
      %s32 = sphi 0, %s29
      %s33 = sphi 0, %s32
      %s49 = sphi 0, %s33
      %s55 = sphi 0, %s57
      %s58 = sphi 0, %s55
      %s59 = sphi 0, %s58
      %s75 = sphi 0, %s59
      %s79 = sphi 0, %s79
      %s81 = sphi 0, %s79
      %s82 = sphi 0, %s81
      %s96 = sphi 0, %s82
      %s100 = sphi 0, %s100
      %s102 = sphi 0, %s100
      %s103 = sphi 0, %s102
      %s117 = sphi 0, %s103
      %s121 = sphi 0, %s121
      %s123 = sphi 0, %s121
      %s124 = sphi 0, %s123
      %s138 = sphi 0, %s124
      %s142 = sphi 0, %s142
      %s144 = sphi 0, %s142
      %s145 = sphi 0, %s144
      %s159 = sphi 0, %s145
    $region4: #{tpu_custom_call.1} parent=1 // loop_header_branch
      %22 = sbr.rel (%p20) target = $region8
    $region5: #{tpu_custom_call.1} parent=1 // loop_body
      %s24 = ssub.s32 %s19, 1
      %s25 = ssub.s32 %s19, 2
      %s26 = sadd.s32 %s19, 1
      %s27 = ssub.s32 %s19, %s26
      %p28 = scmp.eq.s32.totalorder %s27, 0
      %s30 = sadd.s32 %s29, 1
      %s31 = scalar_select %p28, %s29, %s30
      %p34 = pneg %p28
      %p35 = scmp.eq.s32.totalorder %s19, 1
      %p36 = por %p34, %p35
      %p37 = scmp.ne.s32.totalorder %s29, %s32
      %p38 = scmp.eq.s32.totalorder %s19, 0
      %p39 = por %p37, %p38
      %p40 = scmp.ne.s32.totalorder %s29, %s32
      %p41 = scmp.eq.s32.totalorder %s24, 1
      %p42 = por %p40, %p41
      %p43 = scmp.ne.s32.totalorder %s32, %s33
      %p44 = scmp.eq.s32.totalorder %s24, 0
      %p45 = por %p43, %p44
      %p46 = scmp.ne.s32.totalorder %s32, %s33
      %p47 = scmp.eq.s32.totalorder %s25, 1
      %p48 = por %p46, %p47
      %p50 = scmp.ne.s32.totalorder %s33, %s49
      %p51 = scmp.eq.s32.totalorder %s25, 0
      %p52 = por %p50, %p51
      %s53 = ssub.s32 %s19, %s26
      %p54 = scmp.eq.s32.totalorder %s53, 0
      %s56 = sadd.s32 %s55, 1
      %s57 = scalar_select %p54, %s55, %s56
      %p60 = pneg %p54
      %p61 = scmp.eq.s32.totalorder %s19, 1
      %p62 = por %p60, %p61
      %p63 = scmp.ne.s32.totalorder %s55, %s58
      %p64 = scmp.eq.s32.totalorder %s19, 0
      %p65 = por %p63, %p64
      %p66 = scmp.ne.s32.totalorder %s55, %s58
      %p67 = scmp.eq.s32.totalorder %s24, 1
      %p68 = por %p66, %p67
      %p69 = scmp.ne.s32.totalorder %s58, %s59
      %p70 = scmp.eq.s32.totalorder %s24, 0
      %p71 = por %p69, %p70
      %p72 = scmp.ne.s32.totalorder %s58, %s59
      %p73 = scmp.eq.s32.totalorder %s25, 1
      %p74 = por %p72, %p73
      %p76 = scmp.ne.s32.totalorder %s59, %s75
      %p77 = scmp.eq.s32.totalorder %s25, 0
      %p78 = por %p76, %p77
      %s80 = sadd.s32 %s79, 1
      %p83 = scmp.eq.s32.totalorder %s19, 1
      %p84 = scmp.ne.s32.totalorder %s79, %s81
      %p85 = scmp.eq.s32.totalorder %s19, 0
      %p86 = por %p84, %p85
      %p87 = scmp.ne.s32.totalorder %s79, %s81
      %p88 = scmp.eq.s32.totalorder %s24, 1
      %p89 = por %p87, %p88
      %p90 = scmp.ne.s32.totalorder %s81, %s82
      %p91 = scmp.eq.s32.totalorder %s24, 0
      %p92 = por %p90, %p91
      %p93 = scmp.ne.s32.totalorder %s81, %s82
      %p94 = scmp.eq.s32.totalorder %s25, 1
      %p95 = por %p93, %p94
      %p97 = scmp.ne.s32.totalorder %s82, %s96
      %p98 = scmp.eq.s32.totalorder %s25, 0
      %p99 = por %p97, %p98
      %s101 = sadd.s32 %s100, 1
      %p104 = scmp.eq.s32.totalorder %s19, 1
      %p105 = scmp.ne.s32.totalorder %s100, %s102
      %p106 = scmp.eq.s32.totalorder %s19, 0
      %p107 = por %p105, %p106
      %p108 = scmp.ne.s32.totalorder %s100, %s102
      %p109 = scmp.eq.s32.totalorder %s24, 1
      %p110 = por %p108, %p109
      %p111 = scmp.ne.s32.totalorder %s102, %s103
      %p112 = scmp.eq.s32.totalorder %s24, 0
      %p113 = por %p111, %p112
      %p114 = scmp.ne.s32.totalorder %s102, %s103
      %p115 = scmp.eq.s32.totalorder %s25, 1
      %p116 = por %p114, %p115
      %p118 = scmp.ne.s32.totalorder %s103, %s117
      %p119 = scmp.eq.s32.totalorder %s25, 0
      %p120 = por %p118, %p119
      %s122 = sadd.s32 %s121, 1
      %p125 = scmp.eq.s32.totalorder %s19, 1
      %p126 = scmp.ne.s32.totalorder %s121, %s123
      %p127 = scmp.eq.s32.totalorder %s19, 0
      %p128 = por %p126, %p127
      %p129 = scmp.ne.s32.totalorder %s121, %s123
      %p130 = scmp.eq.s32.totalorder %s24, 1
      %p131 = por %p129, %p130
      %p132 = scmp.ne.s32.totalorder %s123, %s124
      %p133 = scmp.eq.s32.totalorder %s24, 0
      %p134 = por %p132, %p133
      %p135 = scmp.ne.s32.totalorder %s123, %s124
      %p136 = scmp.eq.s32.totalorder %s25, 1
      %p137 = por %p135, %p136
      %p139 = scmp.ne.s32.totalorder %s124, %s138
      %p140 = scmp.eq.s32.totalorder %s25, 0
      %p141 = por %p139, %p140
      %s143 = sadd.s32 %s142, 1
      %p146 = scmp.eq.s32.totalorder %s19, 1
      %p147 = scmp.ne.s32.totalorder %s142, %s144
      %p148 = scmp.eq.s32.totalorder %s19, 0
      %p149 = por %p147, %p148
      %p150 = scmp.ne.s32.totalorder %s142, %s144
      %p151 = scmp.eq.s32.totalorder %s24, 1
      %p152 = por %p150, %p151
      %p153 = scmp.ne.s32.totalorder %s144, %s145
      %p154 = scmp.eq.s32.totalorder %s24, 0
      %p155 = por %p153, %p154
      %p156 = scmp.ne.s32.totalorder %s144, %s145
      %p157 = scmp.eq.s32.totalorder %s25, 1
      %p158 = por %p156, %p157
      %p160 = scmp.ne.s32.totalorder %s145, %s159
      %p161 = scmp.eq.s32.totalorder %s25, 0
      %p162 = por %p160, %p161
      %p163 = scmp.le.s32.totalorder 1, %s19
      %p164 = scmp.lt.s32.totalorder %s19, 3
      %p165 = pnand %p163, %p164
      %p166 = pneg %p165
      // Predicated region
      $region9: #{tpu_custom_call.1} parent=5 // pred_check
        _
      $region10: #{tpu_custom_call.1} parent=5 // pred_check_branch
        %168 = sbr.rel (%p165) target = $region12
      $region11: #{tpu_custom_call.1} parent=5 // pred_region
        %s169 = ssub.s32 %s19, 1
        // Predicated region
        $region13: #{tpu_custom_call.1} parent=11 // pred_check
          %p170 = pneg %p92
        $region14: #{tpu_custom_call.1} parent=11 // pred_check_branch
          %172 = sbr.rel (%p170) target = $region16
        $region15: #{tpu_custom_call.1} parent=11 // pred_region
          %s174 = ssub.s32 128, 128
          %175 = vsyncadd [#allocation7], %s174
          %s177 = sshll.u32 [#allocation8], 4
          %s178 = int_to_ptr.vmem [resolvable:$true] %s177
          %180 = dma.hbm_to_vmem [thread:$0]  %s2, 128, %s178, [#allocation7]
        $region16: #{tpu_custom_call.1} parent=11 // pred_fallthru
          _
        // Predicated region
        $region17: #{tpu_custom_call.1} parent=11 // pred_check
          %p181 = pneg %p113
        $region18: #{tpu_custom_call.1} parent=11 // pred_check_branch
          %183 = sbr.rel (%p181) target = $region20
        $region19: #{tpu_custom_call.1} parent=11 // pred_region
          %s185 = ssub.s32 8192, 8192
          %186 = vsyncadd [#allocation10], %s185
          %s187 = sshll.u32 [#allocation9], 4
          %s188 = int_to_ptr.vmem [resolvable:$true] %s187
          %193 = dma.hbm_to_vmem [thread:$0]  %s3, 8192, %s188, [#allocation10], 64, 64, 4
        $region20: #{tpu_custom_call.1} parent=11 // pred_fallthru
          _
        // Predicated region
        $region21: #{tpu_custom_call.1} parent=11 // pred_check
          %p194 = pneg %p134
        $region22: #{tpu_custom_call.1} parent=11 // pred_check_branch
          %196 = sbr.rel (%p194) target = $region24
        $region23: #{tpu_custom_call.1} parent=11 // pred_region
          %s198 = ssub.s32 16, 16
          %199 = vsyncadd [#allocation10], %s198
          %s201 = sshll.u32 [#allocation11], 4
          %s202 = int_to_ptr.vmem [resolvable:$true] %s201
          %204 = dma.hbm_to_vmem [thread:$0]  %s4, 16, %s202, [#allocation10]
        $region24: #{tpu_custom_call.1} parent=11 // pred_fallthru
          _
      $region12: #{tpu_custom_call.1} parent=5 // pred_fallthru
        _
      %p205 = scmp.lt.s32.totalorder %s19, 2
      // Predicated region
      $region25: #{tpu_custom_call.1} parent=5 // pred_check
        %p206 = pneg %p205
      $region26: #{tpu_custom_call.1} parent=5 // pred_check_branch
        %208 = sbr.rel (%p206) target = $region28
      $region27: #{tpu_custom_call.1} parent=5 // pred_region
        // Predicated region
        $region29: #{tpu_custom_call.1} parent=27 // pred_check
          %p209 = pneg %p39
        $region30: #{tpu_custom_call.1} parent=27 // pred_check_branch
          %211 = sbr.rel (%p209) target = $region32
        $region31: #{tpu_custom_call.1} parent=27 // pred_region
          %s212 = sand.u32 %s29, 1
          %s213 = scalar_lea.sflag [#allocation4], %s212
          %s214 = sand.u32 %s29, 1
          %s215 = smul.addr %s214, 16
          %s216 = scalar_lea.vmem [#allocation3], %s215
          %s217 = smul.u32 4, %s19
          %s219 = ssub.s32 256, 256
          %220 = vsyncadd %s213, %s219
          %s221 = smul.addr %s217, 64
          %s222 = scalar_lea.hbm %s0, %s221
          %s224 = sshll.u32 %s216, 4
          %s225 = int_to_ptr.vmem [resolvable:$true] %s224
          %227 = dma.hbm_to_vmem [thread:$0]  %s222, 256, %s225, %s213
        $region32: #{tpu_custom_call.1} parent=27 // pred_fallthru
          _
        // Predicated region
        $region33: #{tpu_custom_call.1} parent=27 // pred_check
          %p228 = pneg %p65
        $region34: #{tpu_custom_call.1} parent=27 // pred_check_branch
          %230 = sbr.rel (%p228) target = $region36
        $region35: #{tpu_custom_call.1} parent=27 // pred_region
          %s231 = sand.u32 %s19, 1
          %s232 = scalar_lea.sflag [#allocation7], %s231
          %s233 = sand.u32 %s55, 1
          %s234 = smul.addr %s233, 2048
          %s235 = scalar_lea.vmem [#allocation6], %s234
          %s236 = smul.u32 64, %s19
          %s238 = ssub.s32 32768, 32768
          %239 = vsyncadd %s232, %s238
          %s240 = smul.addr %s236, 8
          %s241 = smul.addr %s240, 64
          %s242 = scalar_lea.hbm %s1, %s241
          %s243 = sshll.u32 %s235, 4
          %s244 = int_to_ptr.vmem [resolvable:$true] %s243
          %249 = dma.hbm_to_vmem [thread:$0]  %s242, 32768, %s244, %s232, 512, 512, 32
        $region36: #{tpu_custom_call.1} parent=27 // pred_fallthru
          _
      $region28: #{tpu_custom_call.1} parent=5 // pred_fallthru
        _
      %p250 = scmp.le.s32.totalorder 1, %s19
      %p251 = scmp.lt.s32.totalorder %s19, 3
      %p252 = pnand %p250, %p251
      %p253 = pneg %p252
      // Predicated region
      $region37: #{tpu_custom_call.1} parent=5 // pred_check
        _
      $region38: #{tpu_custom_call.1} parent=5 // pred_check_branch
        %255 = sbr.rel (%p252) target = $region40
      $region39: #{tpu_custom_call.1} parent=5 // pred_region
        %s256 = ssub.s32 %s19, 1
        %s257 = sand.u32 %s32, 1
        %s258 = scalar_lea.sflag [#allocation4], %s257
        %s259 = sand.u32 %s32, 1
        %s260 = smul.addr %s259, 16
        %s261 = scalar_lea.vmem [#allocation3], %s260
        // Predicated region
        $region41: #{tpu_custom_call.1} parent=39 // pred_check
          %p262 = pneg %p45
        $region42: #{tpu_custom_call.1} parent=39 // pred_check_branch
          %264 = sbr.rel (%p262) target = $region44
        $region43: #{tpu_custom_call.1} parent=39 // pred_region
          %265 = dma.done %s258, 256
        $region44: #{tpu_custom_call.1} parent=39 // pred_fallthru
          _
        %s266 = sand.u32 %s24, 1
        %s267 = scalar_lea.sflag [#allocation7], %s266
        %s268 = sand.u32 %s58, 1
        %s269 = smul.addr %s268, 2048
        %s270 = scalar_lea.vmem [#allocation6], %s269
        // Predicated region
        $region45: #{tpu_custom_call.1} parent=39 // pred_check
          %p271 = pneg %p71
        $region46: #{tpu_custom_call.1} parent=39 // pred_check_branch
          %273 = sbr.rel (%p271) target = $region48
        $region47: #{tpu_custom_call.1} parent=39 // pred_region
          %274 = dma.done %s267, 32768
        $region48: #{tpu_custom_call.1} parent=39 // pred_fallthru
          _
        // Predicated region
        $region49: #{tpu_custom_call.1} parent=39 // pred_check
          %p275 = pneg %p92
        $region50: #{tpu_custom_call.1} parent=39 // pred_check_branch
          %277 = sbr.rel (%p275) target = $region52
        $region51: #{tpu_custom_call.1} parent=39 // pred_region
          %278 = dma.done [#allocation7], 128
        $region52: #{tpu_custom_call.1} parent=39 // pred_fallthru
          _
        // Predicated region
        $region53: #{tpu_custom_call.1} parent=39 // pred_check
          %p279 = pneg %p113
        $region54: #{tpu_custom_call.1} parent=39 // pred_check_branch
          %281 = sbr.rel (%p279) target = $region56
        $region55: #{tpu_custom_call.1} parent=39 // pred_region
          %282 = dma.done [#allocation10], 8192
        $region56: #{tpu_custom_call.1} parent=39 // pred_fallthru
          _
        // Predicated region
        $region57: #{tpu_custom_call.1} parent=39 // pred_check
          %p283 = pneg %p134
        $region58: #{tpu_custom_call.1} parent=39 // pred_check_branch
          %285 = sbr.rel (%p283) target = $region60
        $region59: #{tpu_custom_call.1} parent=39 // pred_region
          %286 = dma.done [#allocation10], 16
        $region60: #{tpu_custom_call.1} parent=39 // pred_fallthru
          _
        %s287 = sand.u32 %s32, 1
        %s288 = scalar_lea.sflag [#allocation4], %s287
        %s289 = sand.u32 %s32, 1
        %s290 = smul.addr %s289, 16
        %s291 = scalar_lea.vmem [#allocation3], %s290
        %p292 = pneg %p45
        %p293 = pneg %p42
        %s294 = sand.u32 %s24, 1
        %s295 = scalar_lea.sflag [#allocation7], %s294
        %s296 = sand.u32 %s58, 1
        %s297 = smul.addr %s296, 2048
        %s298 = scalar_lea.vmem [#allocation6], %s297
        %p299 = pneg %p71
        %p300 = pneg %p68
        %p301 = pneg %p92
        %p302 = pneg %p89
        %p303 = pneg %p113
        %p304 = pneg %p110
        %p305 = pneg %p134
        %p306 = pneg %p131
        %p307 = pneg %p155
        %p308 = pneg %p152
        %s309 = smul.u32 4, %s24
        %s310 = smul.u32 64, %s24
        %p312 = scmp.eq.s32.totalorder %s24, 0
        // Predicated region
        $region61: #{tpu_custom_call.1} parent=39 // pred_check
          %p313 = pneg %p312
        $region62: #{tpu_custom_call.1} parent=39 // pred_check_branch
          %315 = sbr.rel (%p313) target = $region64
        $region63: #{tpu_custom_call.1} parent=39 // pred_region
          %316 = vst [vmem:[#allocation2] sm:$0xff] 0.0
          %317 = vst [vmem:[#allocation2 + $0x8] sm:$0xff] 0.0
          %318 = vst [vmem:[#allocation2 + $0x10] sm:$0xff] 0.0
          %319 = vst [vmem:[#allocation2 + $0x18] sm:$0xff] 0.0
          %320 = vst [vmem:[#allocation2 + $0x20] sm:$0xff] 0.0
          %321 = vst [vmem:[#allocation2 + $0x28] sm:$0xff] 0.0
          %322 = vst [vmem:[#allocation2 + $0x30] sm:$0xff] 0.0
          %323 = vst [vmem:[#allocation2 + $0x38] sm:$0xff] 0.0
        $region64: #{tpu_custom_call.1} parent=39 // pred_fallthru
          _
        %v324 = vld [vmem:[#allocation2] sm:$0xff]
        %v325 = vld [vmem:[#allocation2 + $0x8] sm:$0xff]
        %v326 = vld [vmem:[#allocation2 + $0x10] sm:$0xff]
        %v327 = vld [vmem:[#allocation2 + $0x18] sm:$0xff]
        %v328 = vld [vmem:[#allocation2 + $0x20] sm:$0xff]
        %v329 = vld [vmem:[#allocation2 + $0x28] sm:$0xff]
        %v330 = vld [vmem:[#allocation2 + $0x30] sm:$0xff]
        %v331 = vld [vmem:[#allocation2 + $0x38] sm:$0xff]
        %v332 = vld [vmem:[%s261] sm:$0xff]
        %v333 = vld [vmem:[%s261 + $0x8] sm:$0xff]
        %v334 = vld [vmem:[%s270] sm:$0xff]
        %v335 = vld [vmem:[%s270 + $0x8] sm:$0xff]
        %v336 = vld [vmem:[%s270 + $0x10] sm:$0xff]
        %v337 = vld [vmem:[%s270 + $0x18] sm:$0xff]
        %v338 = vld [vmem:[%s270 + $0x20] sm:$0xff]
        %v339 = vld [vmem:[%s270 + $0x28] sm:$0xff]
        %v340 = vld [vmem:[%s270 + $0x30] sm:$0xff]
        %v341 = vld [vmem:[%s270 + $0x38] sm:$0xff]
        %v342 = vld [vmem:[%s270 + $0x40] sm:$0xff]
        %v343 = vld [vmem:[%s270 + $0x48] sm:$0xff]
        %v344 = vld [vmem:[%s270 + $0x50] sm:$0xff]
        %v345 = vld [vmem:[%s270 + $0x58] sm:$0xff]
        %v346 = vld [vmem:[%s270 + $0x60] sm:$0xff]
        %v347 = vld [vmem:[%s270 + $0x68] sm:$0xff]
        %v348 = vld [vmem:[%s270 + $0x70] sm:$0xff]
        %v349 = vld [vmem:[%s270 + $0x78] sm:$0xff]
        %v350 = vld [vmem:[%s270 + $0x80] sm:$0xff]
        %v351 = vld [vmem:[%s270 + $0x88] sm:$0xff]
        %v352 = vld [vmem:[%s270 + $0x90] sm:$0xff]
        %v353 = vld [vmem:[%s270 + $0x98] sm:$0xff]
        %v354 = vld [vmem:[%s270 + $0xa0] sm:$0xff]
        %v355 = vld [vmem:[%s270 + $0xa8] sm:$0xff]
        %v356 = vld [vmem:[%s270 + $0xb0] sm:$0xff]
        %v357 = vld [vmem:[%s270 + $0xb8] sm:$0xff]
        %v358 = vld [vmem:[%s270 + $0xc0] sm:$0xff]
        %v359 = vld [vmem:[%s270 + $0xc8] sm:$0xff]
        %v360 = vld [vmem:[%s270 + $0xd0] sm:$0xff]
        %v361 = vld [vmem:[%s270 + $0xd8] sm:$0xff]
        %v362 = vld [vmem:[%s270 + $0xe0] sm:$0xff]
        %v363 = vld [vmem:[%s270 + $0xe8] sm:$0xff]
        %v364 = vld [vmem:[%s270 + $0xf0] sm:$0xff]
        %v365 = vld [vmem:[%s270 + $0xf8] sm:$0xff]
        %v366 = vld [vmem:[%s270 + $0x100] sm:$0xff]
        %v367 = vld [vmem:[%s270 + $0x108] sm:$0xff]
        %v368 = vld [vmem:[%s270 + $0x110] sm:$0xff]
        %v369 = vld [vmem:[%s270 + $0x118] sm:$0xff]
        %v370 = vld [vmem:[%s270 + $0x120] sm:$0xff]
        %v371 = vld [vmem:[%s270 + $0x128] sm:$0xff]
        %v372 = vld [vmem:[%s270 + $0x130] sm:$0xff]
        %v373 = vld [vmem:[%s270 + $0x138] sm:$0xff]
        %v374 = vld [vmem:[%s270 + $0x140] sm:$0xff]
        %v375 = vld [vmem:[%s270 + $0x148] sm:$0xff]
        %v376 = vld [vmem:[%s270 + $0x150] sm:$0xff]
        %v377 = vld [vmem:[%s270 + $0x158] sm:$0xff]
        %v378 = vld [vmem:[%s270 + $0x160] sm:$0xff]
        %v379 = vld [vmem:[%s270 + $0x168] sm:$0xff]
        %v380 = vld [vmem:[%s270 + $0x170] sm:$0xff]
        %v381 = vld [vmem:[%s270 + $0x178] sm:$0xff]
        %v382 = vld [vmem:[%s270 + $0x180] sm:$0xff]
        %v383 = vld [vmem:[%s270 + $0x188] sm:$0xff]
        %v384 = vld [vmem:[%s270 + $0x190] sm:$0xff]
        %v385 = vld [vmem:[%s270 + $0x198] sm:$0xff]
        %v386 = vld [vmem:[%s270 + $0x1a0] sm:$0xff]
        %v387 = vld [vmem:[%s270 + $0x1a8] sm:$0xff]
        %v388 = vld [vmem:[%s270 + $0x1b0] sm:$0xff]
        %v389 = vld [vmem:[%s270 + $0x1b8] sm:$0xff]
        %v390 = vld [vmem:[%s270 + $0x1c0] sm:$0xff]
        %v391 = vld [vmem:[%s270 + $0x1c8] sm:$0xff]
        %v392 = vld [vmem:[%s270 + $0x1d0] sm:$0xff]
        %v393 = vld [vmem:[%s270 + $0x1d8] sm:$0xff]
        %v394 = vld [vmem:[%s270 + $0x1e0] sm:$0xff]
        %v395 = vld [vmem:[%s270 + $0x1e8] sm:$0xff]
        %v396 = vld [vmem:[%s270 + $0x1f0] sm:$0xff]
        %v397 = vld [vmem:[%s270 + $0x1f8] sm:$0xff]
        %v398 = vld [vmem:[%s270 + $0x200] sm:$0xff]
        %v399 = vld [vmem:[%s270 + $0x208] sm:$0xff]
        %v400 = vld [vmem:[%s270 + $0x210] sm:$0xff]
        %v401 = vld [vmem:[%s270 + $0x218] sm:$0xff]
        %v402 = vld [vmem:[%s270 + $0x220] sm:$0xff]
        %v403 = vld [vmem:[%s270 + $0x228] sm:$0xff]
        %v404 = vld [vmem:[%s270 + $0x230] sm:$0xff]
        %v405 = vld [vmem:[%s270 + $0x238] sm:$0xff]
        %v406 = vld [vmem:[%s270 + $0x240] sm:$0xff]
        %v407 = vld [vmem:[%s270 + $0x248] sm:$0xff]
        %v408 = vld [vmem:[%s270 + $0x250] sm:$0xff]
        %v409 = vld [vmem:[%s270 + $0x258] sm:$0xff]
        %v410 = vld [vmem:[%s270 + $0x260] sm:$0xff]
        %v411 = vld [vmem:[%s270 + $0x268] sm:$0xff]
        %v412 = vld [vmem:[%s270 + $0x270] sm:$0xff]
        %v413 = vld [vmem:[%s270 + $0x278] sm:$0xff]
        %v414 = vld [vmem:[%s270 + $0x280] sm:$0xff]
        %v415 = vld [vmem:[%s270 + $0x288] sm:$0xff]
        %v416 = vld [vmem:[%s270 + $0x290] sm:$0xff]
        %v417 = vld [vmem:[%s270 + $0x298] sm:$0xff]
        %v418 = vld [vmem:[%s270 + $0x2a0] sm:$0xff]
        %v419 = vld [vmem:[%s270 + $0x2a8] sm:$0xff]
        %v420 = vld [vmem:[%s270 + $0x2b0] sm:$0xff]
        %v421 = vld [vmem:[%s270 + $0x2b8] sm:$0xff]
        %v422 = vld [vmem:[%s270 + $0x2c0] sm:$0xff]
        %v423 = vld [vmem:[%s270 + $0x2c8] sm:$0xff]
        %v424 = vld [vmem:[%s270 + $0x2d0] sm:$0xff]
        %v425 = vld [vmem:[%s270 + $0x2d8] sm:$0xff]
        %v426 = vld [vmem:[%s270 + $0x2e0] sm:$0xff]
        %v427 = vld [vmem:[%s270 + $0x2e8] sm:$0xff]
        %v428 = vld [vmem:[%s270 + $0x2f0] sm:$0xff]
        %v429 = vld [vmem:[%s270 + $0x2f8] sm:$0xff]
        %v430 = vld [vmem:[%s270 + $0x300] sm:$0xff]
        %v431 = vld [vmem:[%s270 + $0x308] sm:$0xff]
        %v432 = vld [vmem:[%s270 + $0x310] sm:$0xff]
        %v433 = vld [vmem:[%s270 + $0x318] sm:$0xff]
        %v434 = vld [vmem:[%s270 + $0x320] sm:$0xff]
        %v435 = vld [vmem:[%s270 + $0x328] sm:$0xff]
        %v436 = vld [vmem:[%s270 + $0x330] sm:$0xff]
        %v437 = vld [vmem:[%s270 + $0x338] sm:$0xff]
        %v438 = vld [vmem:[%s270 + $0x340] sm:$0xff]
        %v439 = vld [vmem:[%s270 + $0x348] sm:$0xff]
        %v440 = vld [vmem:[%s270 + $0x350] sm:$0xff]
        %v441 = vld [vmem:[%s270 + $0x358] sm:$0xff]
        %v442 = vld [vmem:[%s270 + $0x360] sm:$0xff]
        %v443 = vld [vmem:[%s270 + $0x368] sm:$0xff]
        %v444 = vld [vmem:[%s270 + $0x370] sm:$0xff]
        %v445 = vld [vmem:[%s270 + $0x378] sm:$0xff]
        %v446 = vld [vmem:[%s270 + $0x380] sm:$0xff]
        %v447 = vld [vmem:[%s270 + $0x388] sm:$0xff]
        %v448 = vld [vmem:[%s270 + $0x390] sm:$0xff]
        %v449 = vld [vmem:[%s270 + $0x398] sm:$0xff]
        %v450 = vld [vmem:[%s270 + $0x3a0] sm:$0xff]
        %v451 = vld [vmem:[%s270 + $0x3a8] sm:$0xff]
        %v452 = vld [vmem:[%s270 + $0x3b0] sm:$0xff]
        %v453 = vld [vmem:[%s270 + $0x3b8] sm:$0xff]
        %v454 = vld [vmem:[%s270 + $0x3c0] sm:$0xff]
        %v455 = vld [vmem:[%s270 + $0x3c8] sm:$0xff]
        %v456 = vld [vmem:[%s270 + $0x3d0] sm:$0xff]
        %v457 = vld [vmem:[%s270 + $0x3d8] sm:$0xff]
        %v458 = vld [vmem:[%s270 + $0x3e0] sm:$0xff]
        %v459 = vld [vmem:[%s270 + $0x3e8] sm:$0xff]
        %v460 = vld [vmem:[%s270 + $0x3f0] sm:$0xff]
        %v461 = vld [vmem:[%s270 + $0x3f8] sm:$0xff]
        %v462 = vld [vmem:[%s270 + $0x400] sm:$0xff]
        %v463 = vld [vmem:[%s270 + $0x408] sm:$0xff]
        %v464 = vld [vmem:[%s270 + $0x410] sm:$0xff]
        %v465 = vld [vmem:[%s270 + $0x418] sm:$0xff]
        %v466 = vld [vmem:[%s270 + $0x420] sm:$0xff]
        %v467 = vld [vmem:[%s270 + $0x428] sm:$0xff]
        %v468 = vld [vmem:[%s270 + $0x430] sm:$0xff]
        %v469 = vld [vmem:[%s270 + $0x438] sm:$0xff]
        %v470 = vld [vmem:[%s270 + $0x440] sm:$0xff]
        %v471 = vld [vmem:[%s270 + $0x448] sm:$0xff]
        %v472 = vld [vmem:[%s270 + $0x450] sm:$0xff]
        %v473 = vld [vmem:[%s270 + $0x458] sm:$0xff]
        %v474 = vld [vmem:[%s270 + $0x460] sm:$0xff]
        %v475 = vld [vmem:[%s270 + $0x468] sm:$0xff]
        %v476 = vld [vmem:[%s270 + $0x470] sm:$0xff]
        %v477 = vld [vmem:[%s270 + $0x478] sm:$0xff]
        %v478 = vld [vmem:[%s270 + $0x480] sm:$0xff]
        %v479 = vld [vmem:[%s270 + $0x488] sm:$0xff]
        %v480 = vld [vmem:[%s270 + $0x490] sm:$0xff]
        %v481 = vld [vmem:[%s270 + $0x498] sm:$0xff]
        %v482 = vld [vmem:[%s270 + $0x4a0] sm:$0xff]
        %v483 = vld [vmem:[%s270 + $0x4a8] sm:$0xff]
        %v484 = vld [vmem:[%s270 + $0x4b0] sm:$0xff]
        %v485 = vld [vmem:[%s270 + $0x4b8] sm:$0xff]
        %v486 = vld [vmem:[%s270 + $0x4c0] sm:$0xff]
        %v487 = vld [vmem:[%s270 + $0x4c8] sm:$0xff]
        %v488 = vld [vmem:[%s270 + $0x4d0] sm:$0xff]
        %v489 = vld [vmem:[%s270 + $0x4d8] sm:$0xff]
        %v490 = vld [vmem:[%s270 + $0x4e0] sm:$0xff]
        %v491 = vld [vmem:[%s270 + $0x4e8] sm:$0xff]
        %v492 = vld [vmem:[%s270 + $0x4f0] sm:$0xff]
        %v493 = vld [vmem:[%s270 + $0x4f8] sm:$0xff]
        %v494 = vld [vmem:[%s270 + $0x500] sm:$0xff]
        %v495 = vld [vmem:[%s270 + $0x508] sm:$0xff]
        %v496 = vld [vmem:[%s270 + $0x510] sm:$0xff]
        %v497 = vld [vmem:[%s270 + $0x518] sm:$0xff]
        %v498 = vld [vmem:[%s270 + $0x520] sm:$0xff]
        %v499 = vld [vmem:[%s270 + $0x528] sm:$0xff]
        %v500 = vld [vmem:[%s270 + $0x530] sm:$0xff]
        %v501 = vld [vmem:[%s270 + $0x538] sm:$0xff]
        %v502 = vld [vmem:[%s270 + $0x540] sm:$0xff]
        %v503 = vld [vmem:[%s270 + $0x548] sm:$0xff]
        %v504 = vld [vmem:[%s270 + $0x550] sm:$0xff]
        %v505 = vld [vmem:[%s270 + $0x558] sm:$0xff]
        %v506 = vld [vmem:[%s270 + $0x560] sm:$0xff]
        %v507 = vld [vmem:[%s270 + $0x568] sm:$0xff]
        %v508 = vld [vmem:[%s270 + $0x570] sm:$0xff]
        %v509 = vld [vmem:[%s270 + $0x578] sm:$0xff]
        %v510 = vld [vmem:[%s270 + $0x580] sm:$0xff]
        %v511 = vld [vmem:[%s270 + $0x588] sm:$0xff]
        %v512 = vld [vmem:[%s270 + $0x590] sm:$0xff]
        %v513 = vld [vmem:[%s270 + $0x598] sm:$0xff]
        %v514 = vld [vmem:[%s270 + $0x5a0] sm:$0xff]
        %v515 = vld [vmem:[%s270 + $0x5a8] sm:$0xff]
        %v516 = vld [vmem:[%s270 + $0x5b0] sm:$0xff]
        %v517 = vld [vmem:[%s270 + $0x5b8] sm:$0xff]
        %v518 = vld [vmem:[%s270 + $0x5c0] sm:$0xff]
        %v519 = vld [vmem:[%s270 + $0x5c8] sm:$0xff]
        %v520 = vld [vmem:[%s270 + $0x5d0] sm:$0xff]
        %v521 = vld [vmem:[%s270 + $0x5d8] sm:$0xff]
        %v522 = vld [vmem:[%s270 + $0x5e0] sm:$0xff]
        %v523 = vld [vmem:[%s270 + $0x5e8] sm:$0xff]
        %v524 = vld [vmem:[%s270 + $0x5f0] sm:$0xff]
        %v525 = vld [vmem:[%s270 + $0x5f8] sm:$0xff]
        %v526 = vld [vmem:[%s270 + $0x600] sm:$0xff]
        %v527 = vld [vmem:[%s270 + $0x608] sm:$0xff]
        %v528 = vld [vmem:[%s270 + $0x610] sm:$0xff]
        %v529 = vld [vmem:[%s270 + $0x618] sm:$0xff]
        %v530 = vld [vmem:[%s270 + $0x620] sm:$0xff]
        %v531 = vld [vmem:[%s270 + $0x628] sm:$0xff]
        %v532 = vld [vmem:[%s270 + $0x630] sm:$0xff]
        %v533 = vld [vmem:[%s270 + $0x638] sm:$0xff]
        %v534 = vld [vmem:[%s270 + $0x640] sm:$0xff]
        %v535 = vld [vmem:[%s270 + $0x648] sm:$0xff]
        %v536 = vld [vmem:[%s270 + $0x650] sm:$0xff]
        %v537 = vld [vmem:[%s270 + $0x658] sm:$0xff]
        %v538 = vld [vmem:[%s270 + $0x660] sm:$0xff]
        %v539 = vld [vmem:[%s270 + $0x668] sm:$0xff]
        %v540 = vld [vmem:[%s270 + $0x670] sm:$0xff]
        %v541 = vld [vmem:[%s270 + $0x678] sm:$0xff]
        %v542 = vld [vmem:[%s270 + $0x680] sm:$0xff]
        %v543 = vld [vmem:[%s270 + $0x688] sm:$0xff]
        %v544 = vld [vmem:[%s270 + $0x690] sm:$0xff]
        %v545 = vld [vmem:[%s270 + $0x698] sm:$0xff]
        %v546 = vld [vmem:[%s270 + $0x6a0] sm:$0xff]
        %v547 = vld [vmem:[%s270 + $0x6a8] sm:$0xff]
        %v548 = vld [vmem:[%s270 + $0x6b0] sm:$0xff]
        %v549 = vld [vmem:[%s270 + $0x6b8] sm:$0xff]
        %v550 = vld [vmem:[%s270 + $0x6c0] sm:$0xff]
        %v551 = vld [vmem:[%s270 + $0x6c8] sm:$0xff]
        %v552 = vld [vmem:[%s270 + $0x6d0] sm:$0xff]
        %v553 = vld [vmem:[%s270 + $0x6d8] sm:$0xff]
        %v554 = vld [vmem:[%s270 + $0x6e0] sm:$0xff]
        %v555 = vld [vmem:[%s270 + $0x6e8] sm:$0xff]
        %v556 = vld [vmem:[%s270 + $0x6f0] sm:$0xff]
        %v557 = vld [vmem:[%s270 + $0x6f8] sm:$0xff]
        %v558 = vld [vmem:[%s270 + $0x700] sm:$0xff]
        %v559 = vld [vmem:[%s270 + $0x708] sm:$0xff]
        %v560 = vld [vmem:[%s270 + $0x710] sm:$0xff]
        %v561 = vld [vmem:[%s270 + $0x718] sm:$0xff]
        %v562 = vld [vmem:[%s270 + $0x720] sm:$0xff]
        %v563 = vld [vmem:[%s270 + $0x728] sm:$0xff]
        %v564 = vld [vmem:[%s270 + $0x730] sm:$0xff]
        %v565 = vld [vmem:[%s270 + $0x738] sm:$0xff]
        %v566 = vld [vmem:[%s270 + $0x740] sm:$0xff]
        %v567 = vld [vmem:[%s270 + $0x748] sm:$0xff]
        %v568 = vld [vmem:[%s270 + $0x750] sm:$0xff]
        %v569 = vld [vmem:[%s270 + $0x758] sm:$0xff]
        %v570 = vld [vmem:[%s270 + $0x760] sm:$0xff]
        %v571 = vld [vmem:[%s270 + $0x768] sm:$0xff]
        %v572 = vld [vmem:[%s270 + $0x770] sm:$0xff]
        %v573 = vld [vmem:[%s270 + $0x778] sm:$0xff]
        %v574 = vld [vmem:[%s270 + $0x780] sm:$0xff]
        %v575 = vld [vmem:[%s270 + $0x788] sm:$0xff]
        %v576 = vld [vmem:[%s270 + $0x790] sm:$0xff]
        %v577 = vld [vmem:[%s270 + $0x798] sm:$0xff]
        %v578 = vld [vmem:[%s270 + $0x7a0] sm:$0xff]
        %v579 = vld [vmem:[%s270 + $0x7a8] sm:$0xff]
        %v580 = vld [vmem:[%s270 + $0x7b0] sm:$0xff]
        %v581 = vld [vmem:[%s270 + $0x7b8] sm:$0xff]
        %v582 = vld [vmem:[%s270 + $0x7c0] sm:$0xff]
        %v583 = vld [vmem:[%s270 + $0x7c8] sm:$0xff]
        %v584 = vld [vmem:[%s270 + $0x7d0] sm:$0xff]
        %v585 = vld [vmem:[%s270 + $0x7d8] sm:$0xff]
        %v586 = vld [vmem:[%s270 + $0x7e0] sm:$0xff]
        %v587 = vld [vmem:[%s270 + $0x7e8] sm:$0xff]
        %v588 = vld [vmem:[%s270 + $0x7f0] sm:$0xff]
        %v589 = vld [vmem:[%s270 + $0x7f8] sm:$0xff]
        %v592 = vunpack.c.l.b16 %v332
        %v593 = vunpack.c.h.b16 %v332
        %v594 = vunpack.c.l.b16 %v333
        %v595 = vunpack.c.h.b16 %v333
        %v596 = vpack.c.b16 %v592, %v592
        %v597 = vpack.c.b16 %v593, %v593
        %v598 = vpack.c.b16 %v594, %v594
        %v599 = vpack.c.b16 %v595, %v595
        %v860 = vunpack.c.l.b16 %v334
        %v861 = vunpack.c.h.b16 %v334
        %v862 = vunpack.c.l.b16 %v335
        %v863 = vunpack.c.h.b16 %v335
        %v864 = vunpack.c.l.b16 %v336
        %v865 = vunpack.c.h.b16 %v336
        %v866 = vunpack.c.l.b16 %v337
        %v867 = vunpack.c.h.b16 %v337
        %v868 = vunpack.c.l.b16 %v338
        %v869 = vunpack.c.h.b16 %v338
        %v870 = vunpack.c.l.b16 %v339
        %v871 = vunpack.c.h.b16 %v339
        %v872 = vunpack.c.l.b16 %v340
        %v873 = vunpack.c.h.b16 %v340
        %v874 = vunpack.c.l.b16 %v341
        %v875 = vunpack.c.h.b16 %v341
        %v876 = vunpack.c.l.b16 %v342
        %v877 = vunpack.c.h.b16 %v342
        %v878 = vunpack.c.l.b16 %v343
        %v879 = vunpack.c.h.b16 %v343
        %v880 = vunpack.c.l.b16 %v344
        %v881 = vunpack.c.h.b16 %v344
        %v882 = vunpack.c.l.b16 %v345
        %v883 = vunpack.c.h.b16 %v345
        %v884 = vunpack.c.l.b16 %v346
        %v885 = vunpack.c.h.b16 %v346
        %v886 = vunpack.c.l.b16 %v347
        %v887 = vunpack.c.h.b16 %v347
        %v888 = vunpack.c.l.b16 %v348
        %v889 = vunpack.c.h.b16 %v348
        %v890 = vunpack.c.l.b16 %v349
        %v891 = vunpack.c.h.b16 %v349
        %v892 = vunpack.c.l.b16 %v350
        %v893 = vunpack.c.h.b16 %v350
        %v894 = vunpack.c.l.b16 %v351
        %v895 = vunpack.c.h.b16 %v351
        %v896 = vunpack.c.l.b16 %v352
        %v897 = vunpack.c.h.b16 %v352
        %v898 = vunpack.c.l.b16 %v353
        %v899 = vunpack.c.h.b16 %v353
        %v900 = vunpack.c.l.b16 %v354
        %v901 = vunpack.c.h.b16 %v354
        %v902 = vunpack.c.l.b16 %v355
        %v903 = vunpack.c.h.b16 %v355
        %v904 = vunpack.c.l.b16 %v356
        %v905 = vunpack.c.h.b16 %v356
        %v906 = vunpack.c.l.b16 %v357
        %v907 = vunpack.c.h.b16 %v357
        %v908 = vunpack.c.l.b16 %v358
        %v909 = vunpack.c.h.b16 %v358
        %v910 = vunpack.c.l.b16 %v359
        %v911 = vunpack.c.h.b16 %v359
        %v912 = vunpack.c.l.b16 %v360
        %v913 = vunpack.c.h.b16 %v360
        %v914 = vunpack.c.l.b16 %v361
        %v915 = vunpack.c.h.b16 %v361
        %v916 = vunpack.c.l.b16 %v362
        %v917 = vunpack.c.h.b16 %v362
        %v918 = vunpack.c.l.b16 %v363
        %v919 = vunpack.c.h.b16 %v363
        %v920 = vunpack.c.l.b16 %v364
        %v921 = vunpack.c.h.b16 %v364
        %v922 = vunpack.c.l.b16 %v365
        %v923 = vunpack.c.h.b16 %v365
        %v924 = vunpack.c.l.b16 %v366
        %v925 = vunpack.c.h.b16 %v366
        %v926 = vunpack.c.l.b16 %v367
        %v927 = vunpack.c.h.b16 %v367
        %v928 = vunpack.c.l.b16 %v368
        %v929 = vunpack.c.h.b16 %v368
        %v930 = vunpack.c.l.b16 %v369
        %v931 = vunpack.c.h.b16 %v369
        %v932 = vunpack.c.l.b16 %v370
        %v933 = vunpack.c.h.b16 %v370
        %v934 = vunpack.c.l.b16 %v371
        %v935 = vunpack.c.h.b16 %v371
        %v936 = vunpack.c.l.b16 %v372
        %v937 = vunpack.c.h.b16 %v372
        %v938 = vunpack.c.l.b16 %v373
        %v939 = vunpack.c.h.b16 %v373
        %v940 = vunpack.c.l.b16 %v374
        %v941 = vunpack.c.h.b16 %v374
        %v942 = vunpack.c.l.b16 %v375
        %v943 = vunpack.c.h.b16 %v375
        %v944 = vunpack.c.l.b16 %v376
        %v945 = vunpack.c.h.b16 %v376
        %v946 = vunpack.c.l.b16 %v377
        %v947 = vunpack.c.h.b16 %v377
        %v948 = vunpack.c.l.b16 %v378
        %v949 = vunpack.c.h.b16 %v378
        %v950 = vunpack.c.l.b16 %v379
        %v951 = vunpack.c.h.b16 %v379
        %v952 = vunpack.c.l.b16 %v380
        %v953 = vunpack.c.h.b16 %v380
        %v954 = vunpack.c.l.b16 %v381
        %v955 = vunpack.c.h.b16 %v381
        %v956 = vunpack.c.l.b16 %v382
        %v957 = vunpack.c.h.b16 %v382
        %v958 = vunpack.c.l.b16 %v383
        %v959 = vunpack.c.h.b16 %v383
        %v960 = vunpack.c.l.b16 %v384
        %v961 = vunpack.c.h.b16 %v384
        %v962 = vunpack.c.l.b16 %v385
        %v963 = vunpack.c.h.b16 %v385
        %v964 = vunpack.c.l.b16 %v386
        %v965 = vunpack.c.h.b16 %v386
        %v966 = vunpack.c.l.b16 %v387
        %v967 = vunpack.c.h.b16 %v387
        %v968 = vunpack.c.l.b16 %v388
        %v969 = vunpack.c.h.b16 %v388
        %v970 = vunpack.c.l.b16 %v389
        %v971 = vunpack.c.h.b16 %v389
        %v972 = vunpack.c.l.b16 %v390
        %v973 = vunpack.c.h.b16 %v390
        %v974 = vunpack.c.l.b16 %v391
        %v975 = vunpack.c.h.b16 %v391
        %v976 = vunpack.c.l.b16 %v392
        %v977 = vunpack.c.h.b16 %v392
        %v978 = vunpack.c.l.b16 %v393
        %v979 = vunpack.c.h.b16 %v393
        %v980 = vunpack.c.l.b16 %v394
        %v981 = vunpack.c.h.b16 %v394
        %v982 = vunpack.c.l.b16 %v395
        %v983 = vunpack.c.h.b16 %v395
        %v984 = vunpack.c.l.b16 %v396
        %v985 = vunpack.c.h.b16 %v396
        %v986 = vunpack.c.l.b16 %v397
        %v987 = vunpack.c.h.b16 %v397
        %v988 = vunpack.c.l.b16 %v398
        %v989 = vunpack.c.h.b16 %v398
        %v990 = vunpack.c.l.b16 %v399
        %v991 = vunpack.c.h.b16 %v399
        %v992 = vunpack.c.l.b16 %v400
        %v993 = vunpack.c.h.b16 %v400
        %v994 = vunpack.c.l.b16 %v401
        %v995 = vunpack.c.h.b16 %v401
        %v996 = vunpack.c.l.b16 %v402
        %v997 = vunpack.c.h.b16 %v402
        %v998 = vunpack.c.l.b16 %v403
        %v999 = vunpack.c.h.b16 %v403
        %v1000 = vunpack.c.l.b16 %v404
        %v1001 = vunpack.c.h.b16 %v404
        %v1002 = vunpack.c.l.b16 %v405
        %v1003 = vunpack.c.h.b16 %v405
        %v1004 = vunpack.c.l.b16 %v406
        %v1005 = vunpack.c.h.b16 %v406
        %v1006 = vunpack.c.l.b16 %v407
        %v1007 = vunpack.c.h.b16 %v407
        %v1008 = vunpack.c.l.b16 %v408
        %v1009 = vunpack.c.h.b16 %v408
        %v1010 = vunpack.c.l.b16 %v409
        %v1011 = vunpack.c.h.b16 %v409
        %v1012 = vunpack.c.l.b16 %v410
        %v1013 = vunpack.c.h.b16 %v410
        %v1014 = vunpack.c.l.b16 %v411
        %v1015 = vunpack.c.h.b16 %v411
        %v1016 = vunpack.c.l.b16 %v412
        %v1017 = vunpack.c.h.b16 %v412
        %v1018 = vunpack.c.l.b16 %v413
        %v1019 = vunpack.c.h.b16 %v413
        %v1020 = vunpack.c.l.b16 %v414
        %v1021 = vunpack.c.h.b16 %v414
        %v1022 = vunpack.c.l.b16 %v415
        %v1023 = vunpack.c.h.b16 %v415
        %v1024 = vunpack.c.l.b16 %v416
        %v1025 = vunpack.c.h.b16 %v416
        %v1026 = vunpack.c.l.b16 %v417
        %v1027 = vunpack.c.h.b16 %v417
        %v1028 = vunpack.c.l.b16 %v418
        %v1029 = vunpack.c.h.b16 %v418
        %v1030 = vunpack.c.l.b16 %v419
        %v1031 = vunpack.c.h.b16 %v419
        %v1032 = vunpack.c.l.b16 %v420
        %v1033 = vunpack.c.h.b16 %v420
        %v1034 = vunpack.c.l.b16 %v421
        %v1035 = vunpack.c.h.b16 %v421
        %v1036 = vunpack.c.l.b16 %v422
        %v1037 = vunpack.c.h.b16 %v422
        %v1038 = vunpack.c.l.b16 %v423
        %v1039 = vunpack.c.h.b16 %v423
        %v1040 = vunpack.c.l.b16 %v424
        %v1041 = vunpack.c.h.b16 %v424
        %v1042 = vunpack.c.l.b16 %v425
        %v1043 = vunpack.c.h.b16 %v425
        %v1044 = vunpack.c.l.b16 %v426
        %v1045 = vunpack.c.h.b16 %v426
        %v1046 = vunpack.c.l.b16 %v427
        %v1047 = vunpack.c.h.b16 %v427
        %v1048 = vunpack.c.l.b16 %v428
        %v1049 = vunpack.c.h.b16 %v428
        %v1050 = vunpack.c.l.b16 %v429
        %v1051 = vunpack.c.h.b16 %v429
        %v1052 = vunpack.c.l.b16 %v430
        %v1053 = vunpack.c.h.b16 %v430
        %v1054 = vunpack.c.l.b16 %v431
        %v1055 = vunpack.c.h.b16 %v431
        %v1056 = vunpack.c.l.b16 %v432
        %v1057 = vunpack.c.h.b16 %v432
        %v1058 = vunpack.c.l.b16 %v433
        %v1059 = vunpack.c.h.b16 %v433
        %v1060 = vunpack.c.l.b16 %v434
        %v1061 = vunpack.c.h.b16 %v434
        %v1062 = vunpack.c.l.b16 %v435
        %v1063 = vunpack.c.h.b16 %v435
        %v1064 = vunpack.c.l.b16 %v436
        %v1065 = vunpack.c.h.b16 %v436
        %v1066 = vunpack.c.l.b16 %v437
        %v1067 = vunpack.c.h.b16 %v437
        %v1068 = vunpack.c.l.b16 %v438
        %v1069 = vunpack.c.h.b16 %v438
        %v1070 = vunpack.c.l.b16 %v439
        %v1071 = vunpack.c.h.b16 %v439
        %v1072 = vunpack.c.l.b16 %v440
        %v1073 = vunpack.c.h.b16 %v440
        %v1074 = vunpack.c.l.b16 %v441
        %v1075 = vunpack.c.h.b16 %v441
        %v1076 = vunpack.c.l.b16 %v442
        %v1077 = vunpack.c.h.b16 %v442
        %v1078 = vunpack.c.l.b16 %v443
        %v1079 = vunpack.c.h.b16 %v443
        %v1080 = vunpack.c.l.b16 %v444
        %v1081 = vunpack.c.h.b16 %v444
        %v1082 = vunpack.c.l.b16 %v445
        %v1083 = vunpack.c.h.b16 %v445
        %v1084 = vunpack.c.l.b16 %v446
        %v1085 = vunpack.c.h.b16 %v446
        %v1086 = vunpack.c.l.b16 %v447
        %v1087 = vunpack.c.h.b16 %v447
        %v1088 = vunpack.c.l.b16 %v448
        %v1089 = vunpack.c.h.b16 %v448
        %v1090 = vunpack.c.l.b16 %v449
        %v1091 = vunpack.c.h.b16 %v449
        %v1092 = vunpack.c.l.b16 %v450
        %v1093 = vunpack.c.h.b16 %v450
        %v1094 = vunpack.c.l.b16 %v451
        %v1095 = vunpack.c.h.b16 %v451
        %v1096 = vunpack.c.l.b16 %v452
        %v1097 = vunpack.c.h.b16 %v452
        %v1098 = vunpack.c.l.b16 %v453
        %v1099 = vunpack.c.h.b16 %v453
        %v1100 = vunpack.c.l.b16 %v454
        %v1101 = vunpack.c.h.b16 %v454
        %v1102 = vunpack.c.l.b16 %v455
        %v1103 = vunpack.c.h.b16 %v455
        %v1104 = vunpack.c.l.b16 %v456
        %v1105 = vunpack.c.h.b16 %v456
        %v1106 = vunpack.c.l.b16 %v457
        %v1107 = vunpack.c.h.b16 %v457
        %v1108 = vunpack.c.l.b16 %v458
        %v1109 = vunpack.c.h.b16 %v458
        %v1110 = vunpack.c.l.b16 %v459
        %v1111 = vunpack.c.h.b16 %v459
        %v1112 = vunpack.c.l.b16 %v460
        %v1113 = vunpack.c.h.b16 %v460
        %v1114 = vunpack.c.l.b16 %v461
        %v1115 = vunpack.c.h.b16 %v461
        %v1116 = vunpack.c.l.b16 %v462
        %v1117 = vunpack.c.h.b16 %v462
        %v1118 = vunpack.c.l.b16 %v463
        %v1119 = vunpack.c.h.b16 %v463
        %v1120 = vunpack.c.l.b16 %v464
        %v1121 = vunpack.c.h.b16 %v464
        %v1122 = vunpack.c.l.b16 %v465
        %v1123 = vunpack.c.h.b16 %v465
        %v1124 = vunpack.c.l.b16 %v466
        %v1125 = vunpack.c.h.b16 %v466
        %v1126 = vunpack.c.l.b16 %v467
        %v1127 = vunpack.c.h.b16 %v467
        %v1128 = vunpack.c.l.b16 %v468
        %v1129 = vunpack.c.h.b16 %v468
        %v1130 = vunpack.c.l.b16 %v469
        %v1131 = vunpack.c.h.b16 %v469
        %v1132 = vunpack.c.l.b16 %v470
        %v1133 = vunpack.c.h.b16 %v470
        %v1134 = vunpack.c.l.b16 %v471
        %v1135 = vunpack.c.h.b16 %v471
        %v1136 = vunpack.c.l.b16 %v472
        %v1137 = vunpack.c.h.b16 %v472
        %v1138 = vunpack.c.l.b16 %v473
        %v1139 = vunpack.c.h.b16 %v473
        %v1140 = vunpack.c.l.b16 %v474
        %v1141 = vunpack.c.h.b16 %v474
        %v1142 = vunpack.c.l.b16 %v475
        %v1143 = vunpack.c.h.b16 %v475
        %v1144 = vunpack.c.l.b16 %v476
        %v1145 = vunpack.c.h.b16 %v476
        %v1146 = vunpack.c.l.b16 %v477
        %v1147 = vunpack.c.h.b16 %v477
        %v1148 = vunpack.c.l.b16 %v478
        %v1149 = vunpack.c.h.b16 %v478
        %v1150 = vunpack.c.l.b16 %v479
        %v1151 = vunpack.c.h.b16 %v479
        %v1152 = vunpack.c.l.b16 %v480
        %v1153 = vunpack.c.h.b16 %v480
        %v1154 = vunpack.c.l.b16 %v481
        %v1155 = vunpack.c.h.b16 %v481
        %v1156 = vunpack.c.l.b16 %v482
        %v1157 = vunpack.c.h.b16 %v482
        %v1158 = vunpack.c.l.b16 %v483
        %v1159 = vunpack.c.h.b16 %v483
        %v1160 = vunpack.c.l.b16 %v484
        %v1161 = vunpack.c.h.b16 %v484
        %v1162 = vunpack.c.l.b16 %v485
        %v1163 = vunpack.c.h.b16 %v485
        %v1164 = vunpack.c.l.b16 %v486
        %v1165 = vunpack.c.h.b16 %v486
        %v1166 = vunpack.c.l.b16 %v487
        %v1167 = vunpack.c.h.b16 %v487
        %v1168 = vunpack.c.l.b16 %v488
        %v1169 = vunpack.c.h.b16 %v488
        %v1170 = vunpack.c.l.b16 %v489
        %v1171 = vunpack.c.h.b16 %v489
        %v1172 = vunpack.c.l.b16 %v490
        %v1173 = vunpack.c.h.b16 %v490
        %v1174 = vunpack.c.l.b16 %v491
        %v1175 = vunpack.c.h.b16 %v491
        %v1176 = vunpack.c.l.b16 %v492
        %v1177 = vunpack.c.h.b16 %v492
        %v1178 = vunpack.c.l.b16 %v493
        %v1179 = vunpack.c.h.b16 %v493
        %v1180 = vunpack.c.l.b16 %v494
        %v1181 = vunpack.c.h.b16 %v494
        %v1182 = vunpack.c.l.b16 %v495
        %v1183 = vunpack.c.h.b16 %v495
        %v1184 = vunpack.c.l.b16 %v496
        %v1185 = vunpack.c.h.b16 %v496
        %v1186 = vunpack.c.l.b16 %v497
        %v1187 = vunpack.c.h.b16 %v497
        %v1188 = vunpack.c.l.b16 %v498
        %v1189 = vunpack.c.h.b16 %v498
        %v1190 = vunpack.c.l.b16 %v499
        %v1191 = vunpack.c.h.b16 %v499
        %v1192 = vunpack.c.l.b16 %v500
        %v1193 = vunpack.c.h.b16 %v500
        %v1194 = vunpack.c.l.b16 %v501
        %v1195 = vunpack.c.h.b16 %v501
        %v1196 = vunpack.c.l.b16 %v502
        %v1197 = vunpack.c.h.b16 %v502
        %v1198 = vunpack.c.l.b16 %v503
        %v1199 = vunpack.c.h.b16 %v503
        %v1200 = vunpack.c.l.b16 %v504
        %v1201 = vunpack.c.h.b16 %v504
        %v1202 = vunpack.c.l.b16 %v505
        %v1203 = vunpack.c.h.b16 %v505
        %v1204 = vunpack.c.l.b16 %v506
        %v1205 = vunpack.c.h.b16 %v506
        %v1206 = vunpack.c.l.b16 %v507
        %v1207 = vunpack.c.h.b16 %v507
        %v1208 = vunpack.c.l.b16 %v508
        %v1209 = vunpack.c.h.b16 %v508
        %v1210 = vunpack.c.l.b16 %v509
        %v1211 = vunpack.c.h.b16 %v509
        %v1212 = vunpack.c.l.b16 %v510
        %v1213 = vunpack.c.h.b16 %v510
        %v1214 = vunpack.c.l.b16 %v511
        %v1215 = vunpack.c.h.b16 %v511
        %v1216 = vunpack.c.l.b16 %v512
        %v1217 = vunpack.c.h.b16 %v512
        %v1218 = vunpack.c.l.b16 %v513
        %v1219 = vunpack.c.h.b16 %v513
        %v1220 = vunpack.c.l.b16 %v514
        %v1221 = vunpack.c.h.b16 %v514
        %v1222 = vunpack.c.l.b16 %v515
        %v1223 = vunpack.c.h.b16 %v515
        %v1224 = vunpack.c.l.b16 %v516
        %v1225 = vunpack.c.h.b16 %v516
        %v1226 = vunpack.c.l.b16 %v517
        %v1227 = vunpack.c.h.b16 %v517
        %v1228 = vunpack.c.l.b16 %v518
        %v1229 = vunpack.c.h.b16 %v518
        %v1230 = vunpack.c.l.b16 %v519
        %v1231 = vunpack.c.h.b16 %v519
        %v1232 = vunpack.c.l.b16 %v520
        %v1233 = vunpack.c.h.b16 %v520
        %v1234 = vunpack.c.l.b16 %v521
        %v1235 = vunpack.c.h.b16 %v521
        %v1236 = vunpack.c.l.b16 %v522
        %v1237 = vunpack.c.h.b16 %v522
        %v1238 = vunpack.c.l.b16 %v523
        %v1239 = vunpack.c.h.b16 %v523
        %v1240 = vunpack.c.l.b16 %v524
        %v1241 = vunpack.c.h.b16 %v524
        %v1242 = vunpack.c.l.b16 %v525
        %v1243 = vunpack.c.h.b16 %v525
        %v1244 = vunpack.c.l.b16 %v526
        %v1245 = vunpack.c.h.b16 %v526
        %v1246 = vunpack.c.l.b16 %v527
        %v1247 = vunpack.c.h.b16 %v527
        %v1248 = vunpack.c.l.b16 %v528
        %v1249 = vunpack.c.h.b16 %v528
        %v1250 = vunpack.c.l.b16 %v529
        %v1251 = vunpack.c.h.b16 %v529
        %v1252 = vunpack.c.l.b16 %v530
        %v1253 = vunpack.c.h.b16 %v530
        %v1254 = vunpack.c.l.b16 %v531
        %v1255 = vunpack.c.h.b16 %v531
        %v1256 = vunpack.c.l.b16 %v532
        %v1257 = vunpack.c.h.b16 %v532
        %v1258 = vunpack.c.l.b16 %v533
        %v1259 = vunpack.c.h.b16 %v533
        %v1260 = vunpack.c.l.b16 %v534
        %v1261 = vunpack.c.h.b16 %v534
        %v1262 = vunpack.c.l.b16 %v535
        %v1263 = vunpack.c.h.b16 %v535
        %v1264 = vunpack.c.l.b16 %v536
        %v1265 = vunpack.c.h.b16 %v536
        %v1266 = vunpack.c.l.b16 %v537
        %v1267 = vunpack.c.h.b16 %v537
        %v1268 = vunpack.c.l.b16 %v538
        %v1269 = vunpack.c.h.b16 %v538
        %v1270 = vunpack.c.l.b16 %v539
        %v1271 = vunpack.c.h.b16 %v539
        %v1272 = vunpack.c.l.b16 %v540
        %v1273 = vunpack.c.h.b16 %v540
        %v1274 = vunpack.c.l.b16 %v541
        %v1275 = vunpack.c.h.b16 %v541
        %v1276 = vunpack.c.l.b16 %v542
        %v1277 = vunpack.c.h.b16 %v542
        %v1278 = vunpack.c.l.b16 %v543
        %v1279 = vunpack.c.h.b16 %v543
        %v1280 = vunpack.c.l.b16 %v544
        %v1281 = vunpack.c.h.b16 %v544
        %v1282 = vunpack.c.l.b16 %v545
        %v1283 = vunpack.c.h.b16 %v545
        %v1284 = vunpack.c.l.b16 %v546
        %v1285 = vunpack.c.h.b16 %v546
        %v1286 = vunpack.c.l.b16 %v547
        %v1287 = vunpack.c.h.b16 %v547
        %v1288 = vunpack.c.l.b16 %v548
        %v1289 = vunpack.c.h.b16 %v548
        %v1290 = vunpack.c.l.b16 %v549
        %v1291 = vunpack.c.h.b16 %v549
        %v1292 = vunpack.c.l.b16 %v550
        %v1293 = vunpack.c.h.b16 %v550
        %v1294 = vunpack.c.l.b16 %v551
        %v1295 = vunpack.c.h.b16 %v551
        %v1296 = vunpack.c.l.b16 %v552
        %v1297 = vunpack.c.h.b16 %v552
        %v1298 = vunpack.c.l.b16 %v553
        %v1299 = vunpack.c.h.b16 %v553
        %v1300 = vunpack.c.l.b16 %v554
        %v1301 = vunpack.c.h.b16 %v554
        %v1302 = vunpack.c.l.b16 %v555
        %v1303 = vunpack.c.h.b16 %v555
        %v1304 = vunpack.c.l.b16 %v556
        %v1305 = vunpack.c.h.b16 %v556
        %v1306 = vunpack.c.l.b16 %v557
        %v1307 = vunpack.c.h.b16 %v557
        %v1308 = vunpack.c.l.b16 %v558
        %v1309 = vunpack.c.h.b16 %v558
        %v1310 = vunpack.c.l.b16 %v559
        %v1311 = vunpack.c.h.b16 %v559
        %v1312 = vunpack.c.l.b16 %v560
        %v1313 = vunpack.c.h.b16 %v560
        %v1314 = vunpack.c.l.b16 %v561
        %v1315 = vunpack.c.h.b16 %v561
        %v1316 = vunpack.c.l.b16 %v562
        %v1317 = vunpack.c.h.b16 %v562
        %v1318 = vunpack.c.l.b16 %v563
        %v1319 = vunpack.c.h.b16 %v563
        %v1320 = vunpack.c.l.b16 %v564
        %v1321 = vunpack.c.h.b16 %v564
        %v1322 = vunpack.c.l.b16 %v565
        %v1323 = vunpack.c.h.b16 %v565
        %v1324 = vunpack.c.l.b16 %v566
        %v1325 = vunpack.c.h.b16 %v566
        %v1326 = vunpack.c.l.b16 %v567
        %v1327 = vunpack.c.h.b16 %v567
        %v1328 = vunpack.c.l.b16 %v568
        %v1329 = vunpack.c.h.b16 %v568
        %v1330 = vunpack.c.l.b16 %v569
        %v1331 = vunpack.c.h.b16 %v569
        %v1332 = vunpack.c.l.b16 %v570
        %v1333 = vunpack.c.h.b16 %v570
        %v1334 = vunpack.c.l.b16 %v571
        %v1335 = vunpack.c.h.b16 %v571
        %v1336 = vunpack.c.l.b16 %v572
        %v1337 = vunpack.c.h.b16 %v572
        %v1338 = vunpack.c.l.b16 %v573
        %v1339 = vunpack.c.h.b16 %v573
        %v1340 = vunpack.c.l.b16 %v574
        %v1341 = vunpack.c.h.b16 %v574
        %v1342 = vunpack.c.l.b16 %v575
        %v1343 = vunpack.c.h.b16 %v575
        %v1344 = vunpack.c.l.b16 %v576
        %v1345 = vunpack.c.h.b16 %v576
        %v1346 = vunpack.c.l.b16 %v577
        %v1347 = vunpack.c.h.b16 %v577
        %v1348 = vunpack.c.l.b16 %v578
        %v1349 = vunpack.c.h.b16 %v578
        %v1350 = vunpack.c.l.b16 %v579
        %v1351 = vunpack.c.h.b16 %v579
        %v1352 = vunpack.c.l.b16 %v580
        %v1353 = vunpack.c.h.b16 %v580
        %v1354 = vunpack.c.l.b16 %v581
        %v1355 = vunpack.c.h.b16 %v581
        %v1356 = vunpack.c.l.b16 %v582
        %v1357 = vunpack.c.h.b16 %v582
        %v1358 = vunpack.c.l.b16 %v583
        %v1359 = vunpack.c.h.b16 %v583
        %v1360 = vunpack.c.l.b16 %v584
        %v1361 = vunpack.c.h.b16 %v584
        %v1362 = vunpack.c.l.b16 %v585
        %v1363 = vunpack.c.h.b16 %v585
        %v1364 = vunpack.c.l.b16 %v586
        %v1365 = vunpack.c.h.b16 %v586
        %v1366 = vunpack.c.l.b16 %v587
        %v1367 = vunpack.c.h.b16 %v587
        %v1368 = vunpack.c.l.b16 %v588
        %v1369 = vunpack.c.h.b16 %v588
        %v1370 = vunpack.c.l.b16 %v589
        %v1371 = vunpack.c.h.b16 %v589
        %v1372 = vpack.c.b16 %v868, %v860
        %v1373 = vpack.c.b16 %v869, %v861
        %v1374 = vpack.c.b16 %v870, %v862
        %v1375 = vpack.c.b16 %v871, %v863
        %v1376 = vpack.c.b16 %v872, %v864
        %v1377 = vpack.c.b16 %v873, %v865
        %v1378 = vpack.c.b16 %v874, %v866
        %v1379 = vpack.c.b16 %v875, %v867
        %v1380 = vpack.c.b16 %v884, %v876
        %v1381 = vpack.c.b16 %v885, %v877
        %v1382 = vpack.c.b16 %v886, %v878
        %v1383 = vpack.c.b16 %v887, %v879
        %v1384 = vpack.c.b16 %v888, %v880
        %v1385 = vpack.c.b16 %v889, %v881
        %v1386 = vpack.c.b16 %v890, %v882
        %v1387 = vpack.c.b16 %v891, %v883
        %v1388 = vpack.c.b16 %v900, %v892
        %v1389 = vpack.c.b16 %v901, %v893
        %v1390 = vpack.c.b16 %v902, %v894
        %v1391 = vpack.c.b16 %v903, %v895
        %v1392 = vpack.c.b16 %v904, %v896
        %v1393 = vpack.c.b16 %v905, %v897
        %v1394 = vpack.c.b16 %v906, %v898
        %v1395 = vpack.c.b16 %v907, %v899
        %v1396 = vpack.c.b16 %v916, %v908
        %v1397 = vpack.c.b16 %v917, %v909
        %v1398 = vpack.c.b16 %v918, %v910
        %v1399 = vpack.c.b16 %v919, %v911
        %v1400 = vpack.c.b16 %v920, %v912
        %v1401 = vpack.c.b16 %v921, %v913
        %v1402 = vpack.c.b16 %v922, %v914
        %v1403 = vpack.c.b16 %v923, %v915
        %v1404 = vpack.c.b16 %v932, %v924
        %v1405 = vpack.c.b16 %v933, %v925
        %v1406 = vpack.c.b16 %v934, %v926
        %v1407 = vpack.c.b16 %v935, %v927
        %v1408 = vpack.c.b16 %v936, %v928
        %v1409 = vpack.c.b16 %v937, %v929
        %v1410 = vpack.c.b16 %v938, %v930
        %v1411 = vpack.c.b16 %v939, %v931
        %v1412 = vpack.c.b16 %v948, %v940
        %v1413 = vpack.c.b16 %v949, %v941
        %v1414 = vpack.c.b16 %v950, %v942
        %v1415 = vpack.c.b16 %v951, %v943
        %v1416 = vpack.c.b16 %v952, %v944
        %v1417 = vpack.c.b16 %v953, %v945
        %v1418 = vpack.c.b16 %v954, %v946
        %v1419 = vpack.c.b16 %v955, %v947
        %v1420 = vpack.c.b16 %v964, %v956
        %v1421 = vpack.c.b16 %v965, %v957
        %v1422 = vpack.c.b16 %v966, %v958
        %v1423 = vpack.c.b16 %v967, %v959
        %v1424 = vpack.c.b16 %v968, %v960
        %v1425 = vpack.c.b16 %v969, %v961
        %v1426 = vpack.c.b16 %v970, %v962
        %v1427 = vpack.c.b16 %v971, %v963
        %v1428 = vpack.c.b16 %v980, %v972
        %v1429 = vpack.c.b16 %v981, %v973
        %v1430 = vpack.c.b16 %v982, %v974
        %v1431 = vpack.c.b16 %v983, %v975
        %v1432 = vpack.c.b16 %v984, %v976
        %v1433 = vpack.c.b16 %v985, %v977
        %v1434 = vpack.c.b16 %v986, %v978
        %v1435 = vpack.c.b16 %v987, %v979
        %v1436 = vpack.c.b16 %v996, %v988
        %v1437 = vpack.c.b16 %v997, %v989
        %v1438 = vpack.c.b16 %v998, %v990
        %v1439 = vpack.c.b16 %v999, %v991
        %v1440 = vpack.c.b16 %v1000, %v992
        %v1441 = vpack.c.b16 %v1001, %v993
        %v1442 = vpack.c.b16 %v1002, %v994
        %v1443 = vpack.c.b16 %v1003, %v995
        %v1444 = vpack.c.b16 %v1012, %v1004
        %v1445 = vpack.c.b16 %v1013, %v1005
        %v1446 = vpack.c.b16 %v1014, %v1006
        %v1447 = vpack.c.b16 %v1015, %v1007
        %v1448 = vpack.c.b16 %v1016, %v1008
        %v1449 = vpack.c.b16 %v1017, %v1009
        %v1450 = vpack.c.b16 %v1018, %v1010
        %v1451 = vpack.c.b16 %v1019, %v1011
        %v1452 = vpack.c.b16 %v1028, %v1020
        %v1453 = vpack.c.b16 %v1029, %v1021
        %v1454 = vpack.c.b16 %v1030, %v1022
        %v1455 = vpack.c.b16 %v1031, %v1023
        %v1456 = vpack.c.b16 %v1032, %v1024
        %v1457 = vpack.c.b16 %v1033, %v1025
        %v1458 = vpack.c.b16 %v1034, %v1026
        %v1459 = vpack.c.b16 %v1035, %v1027
        %v1460 = vpack.c.b16 %v1044, %v1036
        %v1461 = vpack.c.b16 %v1045, %v1037
        %v1462 = vpack.c.b16 %v1046, %v1038
        %v1463 = vpack.c.b16 %v1047, %v1039
        %v1464 = vpack.c.b16 %v1048, %v1040
        %v1465 = vpack.c.b16 %v1049, %v1041
        %v1466 = vpack.c.b16 %v1050, %v1042
        %v1467 = vpack.c.b16 %v1051, %v1043
        %v1468 = vpack.c.b16 %v1060, %v1052
        %v1469 = vpack.c.b16 %v1061, %v1053
        %v1470 = vpack.c.b16 %v1062, %v1054
        %v1471 = vpack.c.b16 %v1063, %v1055
        %v1472 = vpack.c.b16 %v1064, %v1056
        %v1473 = vpack.c.b16 %v1065, %v1057
        %v1474 = vpack.c.b16 %v1066, %v1058
        %v1475 = vpack.c.b16 %v1067, %v1059
        %v1476 = vpack.c.b16 %v1076, %v1068
        %v1477 = vpack.c.b16 %v1077, %v1069
        %v1478 = vpack.c.b16 %v1078, %v1070
        %v1479 = vpack.c.b16 %v1079, %v1071
        %v1480 = vpack.c.b16 %v1080, %v1072
        %v1481 = vpack.c.b16 %v1081, %v1073
        %v1482 = vpack.c.b16 %v1082, %v1074
        %v1483 = vpack.c.b16 %v1083, %v1075
        %v1484 = vpack.c.b16 %v1092, %v1084
        %v1485 = vpack.c.b16 %v1093, %v1085
        %v1486 = vpack.c.b16 %v1094, %v1086
        %v1487 = vpack.c.b16 %v1095, %v1087
        %v1488 = vpack.c.b16 %v1096, %v1088
        %v1489 = vpack.c.b16 %v1097, %v1089
        %v1490 = vpack.c.b16 %v1098, %v1090
        %v1491 = vpack.c.b16 %v1099, %v1091
        %v1492 = vpack.c.b16 %v1108, %v1100
        %v1493 = vpack.c.b16 %v1109, %v1101
        %v1494 = vpack.c.b16 %v1110, %v1102
        %v1495 = vpack.c.b16 %v1111, %v1103
        %v1496 = vpack.c.b16 %v1112, %v1104
        %v1497 = vpack.c.b16 %v1113, %v1105
        %v1498 = vpack.c.b16 %v1114, %v1106
        %v1499 = vpack.c.b16 %v1115, %v1107
        %v1500 = vpack.c.b16 %v1124, %v1116
        %v1501 = vpack.c.b16 %v1125, %v1117
        %v1502 = vpack.c.b16 %v1126, %v1118
        %v1503 = vpack.c.b16 %v1127, %v1119
        %v1504 = vpack.c.b16 %v1128, %v1120
        %v1505 = vpack.c.b16 %v1129, %v1121
        %v1506 = vpack.c.b16 %v1130, %v1122
        %v1507 = vpack.c.b16 %v1131, %v1123
        %v1508 = vpack.c.b16 %v1140, %v1132
        %v1509 = vpack.c.b16 %v1141, %v1133
        %v1510 = vpack.c.b16 %v1142, %v1134
        %v1511 = vpack.c.b16 %v1143, %v1135
        %v1512 = vpack.c.b16 %v1144, %v1136
        %v1513 = vpack.c.b16 %v1145, %v1137
        %v1514 = vpack.c.b16 %v1146, %v1138
        %v1515 = vpack.c.b16 %v1147, %v1139
        %v1516 = vpack.c.b16 %v1156, %v1148
        %v1517 = vpack.c.b16 %v1157, %v1149
        %v1518 = vpack.c.b16 %v1158, %v1150
        %v1519 = vpack.c.b16 %v1159, %v1151
        %v1520 = vpack.c.b16 %v1160, %v1152
        %v1521 = vpack.c.b16 %v1161, %v1153
        %v1522 = vpack.c.b16 %v1162, %v1154
        %v1523 = vpack.c.b16 %v1163, %v1155
        %v1524 = vpack.c.b16 %v1172, %v1164
        %v1525 = vpack.c.b16 %v1173, %v1165
        %v1526 = vpack.c.b16 %v1174, %v1166
        %v1527 = vpack.c.b16 %v1175, %v1167
        %v1528 = vpack.c.b16 %v1176, %v1168
        %v1529 = vpack.c.b16 %v1177, %v1169
        %v1530 = vpack.c.b16 %v1178, %v1170
        %v1531 = vpack.c.b16 %v1179, %v1171
        %v1532 = vpack.c.b16 %v1188, %v1180
        %v1533 = vpack.c.b16 %v1189, %v1181
        %v1534 = vpack.c.b16 %v1190, %v1182
        %v1535 = vpack.c.b16 %v1191, %v1183
        %v1536 = vpack.c.b16 %v1192, %v1184
        %v1537 = vpack.c.b16 %v1193, %v1185
        %v1538 = vpack.c.b16 %v1194, %v1186
        %v1539 = vpack.c.b16 %v1195, %v1187
        %v1540 = vpack.c.b16 %v1204, %v1196
        %v1541 = vpack.c.b16 %v1205, %v1197
        %v1542 = vpack.c.b16 %v1206, %v1198
        %v1543 = vpack.c.b16 %v1207, %v1199
        %v1544 = vpack.c.b16 %v1208, %v1200
        %v1545 = vpack.c.b16 %v1209, %v1201
        %v1546 = vpack.c.b16 %v1210, %v1202
        %v1547 = vpack.c.b16 %v1211, %v1203
        %v1548 = vpack.c.b16 %v1220, %v1212
        %v1549 = vpack.c.b16 %v1221, %v1213
        %v1550 = vpack.c.b16 %v1222, %v1214
        %v1551 = vpack.c.b16 %v1223, %v1215
        %v1552 = vpack.c.b16 %v1224, %v1216
        %v1553 = vpack.c.b16 %v1225, %v1217
        %v1554 = vpack.c.b16 %v1226, %v1218
        %v1555 = vpack.c.b16 %v1227, %v1219
        %v1556 = vpack.c.b16 %v1236, %v1228
        %v1557 = vpack.c.b16 %v1237, %v1229
        %v1558 = vpack.c.b16 %v1238, %v1230
        %v1559 = vpack.c.b16 %v1239, %v1231
        %v1560 = vpack.c.b16 %v1240, %v1232
        %v1561 = vpack.c.b16 %v1241, %v1233
        %v1562 = vpack.c.b16 %v1242, %v1234
        %v1563 = vpack.c.b16 %v1243, %v1235
        %v1564 = vpack.c.b16 %v1252, %v1244
        %v1565 = vpack.c.b16 %v1253, %v1245
        %v1566 = vpack.c.b16 %v1254, %v1246
        %v1567 = vpack.c.b16 %v1255, %v1247
        %v1568 = vpack.c.b16 %v1256, %v1248
        %v1569 = vpack.c.b16 %v1257, %v1249
        %v1570 = vpack.c.b16 %v1258, %v1250
        %v1571 = vpack.c.b16 %v1259, %v1251
        %v1572 = vpack.c.b16 %v1268, %v1260
        %v1573 = vpack.c.b16 %v1269, %v1261
        %v1574 = vpack.c.b16 %v1270, %v1262
        %v1575 = vpack.c.b16 %v1271, %v1263
        %v1576 = vpack.c.b16 %v1272, %v1264
        %v1577 = vpack.c.b16 %v1273, %v1265
        %v1578 = vpack.c.b16 %v1274, %v1266
        %v1579 = vpack.c.b16 %v1275, %v1267
        %v1580 = vpack.c.b16 %v1284, %v1276
        %v1581 = vpack.c.b16 %v1285, %v1277
        %v1582 = vpack.c.b16 %v1286, %v1278
        %v1583 = vpack.c.b16 %v1287, %v1279
        %v1584 = vpack.c.b16 %v1288, %v1280
        %v1585 = vpack.c.b16 %v1289, %v1281
        %v1586 = vpack.c.b16 %v1290, %v1282
        %v1587 = vpack.c.b16 %v1291, %v1283
        %v1588 = vpack.c.b16 %v1300, %v1292
        %v1589 = vpack.c.b16 %v1301, %v1293
        %v1590 = vpack.c.b16 %v1302, %v1294
        %v1591 = vpack.c.b16 %v1303, %v1295
        %v1592 = vpack.c.b16 %v1304, %v1296
        %v1593 = vpack.c.b16 %v1305, %v1297
        %v1594 = vpack.c.b16 %v1306, %v1298
        %v1595 = vpack.c.b16 %v1307, %v1299
        %v1596 = vpack.c.b16 %v1316, %v1308
        %v1597 = vpack.c.b16 %v1317, %v1309
        %v1598 = vpack.c.b16 %v1318, %v1310
        %v1599 = vpack.c.b16 %v1319, %v1311
        %v1600 = vpack.c.b16 %v1320, %v1312
        %v1601 = vpack.c.b16 %v1321, %v1313
        %v1602 = vpack.c.b16 %v1322, %v1314
        %v1603 = vpack.c.b16 %v1323, %v1315
        %v1604 = vpack.c.b16 %v1332, %v1324
        %v1605 = vpack.c.b16 %v1333, %v1325
        %v1606 = vpack.c.b16 %v1334, %v1326
        %v1607 = vpack.c.b16 %v1335, %v1327
        %v1608 = vpack.c.b16 %v1336, %v1328
        %v1609 = vpack.c.b16 %v1337, %v1329
        %v1610 = vpack.c.b16 %v1338, %v1330
        %v1611 = vpack.c.b16 %v1339, %v1331
        %v1612 = vpack.c.b16 %v1348, %v1340
        %v1613 = vpack.c.b16 %v1349, %v1341
        %v1614 = vpack.c.b16 %v1350, %v1342
        %v1615 = vpack.c.b16 %v1351, %v1343
        %v1616 = vpack.c.b16 %v1352, %v1344
        %v1617 = vpack.c.b16 %v1353, %v1345
        %v1618 = vpack.c.b16 %v1354, %v1346
        %v1619 = vpack.c.b16 %v1355, %v1347
        %v1620 = vpack.c.b16 %v1364, %v1356
        %v1621 = vpack.c.b16 %v1365, %v1357
        %v1622 = vpack.c.b16 %v1366, %v1358
        %v1623 = vpack.c.b16 %v1367, %v1359
        %v1624 = vpack.c.b16 %v1368, %v1360
        %v1625 = vpack.c.b16 %v1369, %v1361
        %v1626 = vpack.c.b16 %v1370, %v1362
        %v1627 = vpack.c.b16 %v1371, %v1363
        %1884 = vmatprep.subr.bf16.mxu0 %v1429
        %1885 = vmatpush1.bf16.msra.mxu0 %v1428
        %1886 = vmatprep.subr.bf16.mxu0 %v1421
        %1887 = vmatpush1.bf16.msra.mxu0 %v1420
        %1888 = vmatprep.subr.bf16.mxu0 %v1413
        %1889 = vmatpush1.bf16.msra.mxu0 %v1412
        %1890 = vmatprep.subr.bf16.mxu0 %v1405
        %1891 = vmatpush1.bf16.msra.mxu0 %v1404
        %1892 = vmatprep.subr.bf16.mxu0 %v1397
        %1893 = vmatpush1.bf16.msra.mxu0 %v1396
        %1894 = vmatprep.subr.bf16.mxu0 %v1389
        %1895 = vmatpush1.bf16.msra.mxu0 %v1388
        %1896 = vmatprep.subr.bf16.mxu0 %v1381
        %1897 = vmatpush1.bf16.msra.mxu0 %v1380
        %1898 = vmatprep.subr.bf16.mxu0 %v1373
        %1899 = vmatpush1.bf16.msra.mxu0 %v1372
        %1900 = vmatprep.subr.bf16.mxu0 %v1493
        %1901 = vmatpush2.bf16.msra.mxu0 %v1492
        %1902 = vmatprep.subr.bf16.mxu0 %v1485
        %1903 = vmatpush2.bf16.msra.mxu0 %v1484
        %1904 = vmatprep.subr.bf16.mxu0 %v1477
        %1905 = vmatpush2.bf16.msra.mxu0 %v1476
        %1906 = vmatprep.subr.bf16.mxu0 %v1469
        %1907 = vmatpush2.bf16.msra.mxu0 %v1468
        %1908 = vmatprep.subr.bf16.mxu0 %v1461
        %1909 = vmatpush2.bf16.msra.mxu0 %v1460
        %1910 = vmatprep.subr.bf16.mxu0 %v1453
        %1911 = vmatpush2.bf16.msra.mxu0 %v1452
        %1912 = vmatprep.subr.bf16.mxu0 %v1445
        %1913 = vmatpush2.bf16.msra.mxu0 %v1444
        %1914 = vmatprep.subr.bf16.mxu0 %v1437
        %1915 = vmatpush2.bf16.msra.mxu0 %v1436
        %1916 = vmatprep.mubr.bf16.mxu0 %v597
        %1917 = vmatmul.mubr.bf16.gmra.mxu0 %v596
        %v1918 = vpop.f32.mrf.mxu0
        %v1919 = vadd.f32 0.0, %v1918
        %v1920 = vpop.f32.mrf.mxu0
        %v1921 = vadd.f32 0.0, %v1920
        %v1922 = vpop.f32.mrf.mxu0
        %v1923 = vpop.f32.mrf.mxu0
        %1924 = vdwg.mxu0
        %1925 = vmatprep.subr.bf16.mxu0 %v1557
        %1926 = vmatpush1.bf16.msra.mxu0 %v1556
        %1927 = vmatprep.subr.bf16.mxu0 %v1549
        %1928 = vmatpush1.bf16.msra.mxu0 %v1548
        %1929 = vmatprep.subr.bf16.mxu0 %v1541
        %1930 = vmatpush1.bf16.msra.mxu0 %v1540
        %1931 = vmatprep.subr.bf16.mxu0 %v1533
        %1932 = vmatpush1.bf16.msra.mxu0 %v1532
        %1933 = vmatprep.subr.bf16.mxu0 %v1525
        %1934 = vmatpush1.bf16.msra.mxu0 %v1524
        %1935 = vmatprep.subr.bf16.mxu0 %v1517
        %1936 = vmatpush1.bf16.msra.mxu0 %v1516
        %1937 = vmatprep.subr.bf16.mxu0 %v1509
        %1938 = vmatpush1.bf16.msra.mxu0 %v1508
        %1939 = vmatprep.subr.bf16.mxu0 %v1501
        %1940 = vmatpush1.bf16.msra.mxu0 %v1500
        %1941 = vmatprep.subr.bf16.mxu0 %v1621
        %1942 = vmatpush2.bf16.msra.mxu0 %v1620
        %1943 = vmatprep.subr.bf16.mxu0 %v1613
        %1944 = vmatpush2.bf16.msra.mxu0 %v1612
        %1945 = vmatprep.subr.bf16.mxu0 %v1605
        %1946 = vmatpush2.bf16.msra.mxu0 %v1604
        %1947 = vmatprep.subr.bf16.mxu0 %v1597
        %1948 = vmatpush2.bf16.msra.mxu0 %v1596
        %1949 = vmatprep.subr.bf16.mxu0 %v1589
        %1950 = vmatpush2.bf16.msra.mxu0 %v1588
        %1951 = vmatprep.subr.bf16.mxu0 %v1581
        %1952 = vmatpush2.bf16.msra.mxu0 %v1580
        %1953 = vmatprep.subr.bf16.mxu0 %v1573
        %1954 = vmatpush2.bf16.msra.mxu0 %v1572
        %1955 = vmatprep.subr.bf16.mxu0 %v1565
        %1956 = vmatpush2.bf16.msra.mxu0 %v1564
        %1957 = vmatprep.mubr.bf16.mxu0 %v599
        %1958 = vmatmul.mubr.bf16.gmra.mxu0 %v598
        %v1959 = vpop.f32.mrf.mxu0
        %v1960 = vadd.f32 %v1919, %v1959
        %v1961 = vpop.f32.mrf.mxu0
        %v1962 = vadd.f32 %v1921, %v1961
        %v1963 = vpop.f32.mrf.mxu0
        %v1964 = vpop.f32.mrf.mxu0
        %1965 = vdwg.mxu0
        %1966 = vmatprep.subr.bf16.mxu0 %v1431
        %1967 = vmatpush1.bf16.msra.mxu0 %v1430
        %1968 = vmatprep.subr.bf16.mxu0 %v1423
        %1969 = vmatpush1.bf16.msra.mxu0 %v1422
        %1970 = vmatprep.subr.bf16.mxu0 %v1415
        %1971 = vmatpush1.bf16.msra.mxu0 %v1414
        %1972 = vmatprep.subr.bf16.mxu0 %v1407
        %1973 = vmatpush1.bf16.msra.mxu0 %v1406
        %1974 = vmatprep.subr.bf16.mxu0 %v1399
        %1975 = vmatpush1.bf16.msra.mxu0 %v1398
        %1976 = vmatprep.subr.bf16.mxu0 %v1391
        %1977 = vmatpush1.bf16.msra.mxu0 %v1390
        %1978 = vmatprep.subr.bf16.mxu0 %v1383
        %1979 = vmatpush1.bf16.msra.mxu0 %v1382
        %1980 = vmatprep.subr.bf16.mxu0 %v1375
        %1981 = vmatpush1.bf16.msra.mxu0 %v1374
        %1982 = vmatprep.subr.bf16.mxu0 %v1495
        %1983 = vmatpush2.bf16.msra.mxu0 %v1494
        %1984 = vmatprep.subr.bf16.mxu0 %v1487
        %1985 = vmatpush2.bf16.msra.mxu0 %v1486
        %1986 = vmatprep.subr.bf16.mxu0 %v1479
        %1987 = vmatpush2.bf16.msra.mxu0 %v1478
        %1988 = vmatprep.subr.bf16.mxu0 %v1471
        %1989 = vmatpush2.bf16.msra.mxu0 %v1470
        %1990 = vmatprep.subr.bf16.mxu0 %v1463
        %1991 = vmatpush2.bf16.msra.mxu0 %v1462
        %1992 = vmatprep.subr.bf16.mxu0 %v1455
        %1993 = vmatpush2.bf16.msra.mxu0 %v1454
        %1994 = vmatprep.subr.bf16.mxu0 %v1447
        %1995 = vmatpush2.bf16.msra.mxu0 %v1446
        %1996 = vmatprep.subr.bf16.mxu0 %v1439
        %1997 = vmatpush2.bf16.msra.mxu0 %v1438
        %1998 = vmatprep.mubr.bf16.mxu0 %v597
        %1999 = vmatmul.mubr.bf16.gmra.mxu0 %v596
        %v2000 = vpop.f32.mrf.mxu0
        %v2001 = vadd.f32 0.0, %v2000
        %v2002 = vpop.f32.mrf.mxu0
        %v2003 = vadd.f32 0.0, %v2002
        %v2004 = vpop.f32.mrf.mxu0
        %v2005 = vpop.f32.mrf.mxu0
        %2006 = vdwg.mxu0
        %2007 = vmatprep.subr.bf16.mxu0 %v1559
        %2008 = vmatpush1.bf16.msra.mxu0 %v1558
        %2009 = vmatprep.subr.bf16.mxu0 %v1551
        %2010 = vmatpush1.bf16.msra.mxu0 %v1550
        %2011 = vmatprep.subr.bf16.mxu0 %v1543
        %2012 = vmatpush1.bf16.msra.mxu0 %v1542
        %2013 = vmatprep.subr.bf16.mxu0 %v1535
        %2014 = vmatpush1.bf16.msra.mxu0 %v1534
        %2015 = vmatprep.subr.bf16.mxu0 %v1527
        %2016 = vmatpush1.bf16.msra.mxu0 %v1526
        %2017 = vmatprep.subr.bf16.mxu0 %v1519
        %2018 = vmatpush1.bf16.msra.mxu0 %v1518
        %2019 = vmatprep.subr.bf16.mxu0 %v1511
        %2020 = vmatpush1.bf16.msra.mxu0 %v1510
        %2021 = vmatprep.subr.bf16.mxu0 %v1503
        %2022 = vmatpush1.bf16.msra.mxu0 %v1502
        %2023 = vmatprep.subr.bf16.mxu0 %v1623
        %2024 = vmatpush2.bf16.msra.mxu0 %v1622
        %2025 = vmatprep.subr.bf16.mxu0 %v1615
        %2026 = vmatpush2.bf16.msra.mxu0 %v1614
        %2027 = vmatprep.subr.bf16.mxu0 %v1607
        %2028 = vmatpush2.bf16.msra.mxu0 %v1606
        %2029 = vmatprep.subr.bf16.mxu0 %v1599
        %2030 = vmatpush2.bf16.msra.mxu0 %v1598
        %2031 = vmatprep.subr.bf16.mxu0 %v1591
        %2032 = vmatpush2.bf16.msra.mxu0 %v1590
        %2033 = vmatprep.subr.bf16.mxu0 %v1583
        %2034 = vmatpush2.bf16.msra.mxu0 %v1582
        %2035 = vmatprep.subr.bf16.mxu0 %v1575
        %2036 = vmatpush2.bf16.msra.mxu0 %v1574
        %2037 = vmatprep.subr.bf16.mxu0 %v1567
        %2038 = vmatpush2.bf16.msra.mxu0 %v1566
        %2039 = vmatprep.mubr.bf16.mxu0 %v599
        %2040 = vmatmul.mubr.bf16.gmra.mxu0 %v598
        %v2041 = vpop.f32.mrf.mxu0
        %v2042 = vadd.f32 %v2001, %v2041
        %v2043 = vpop.f32.mrf.mxu0
        %v2044 = vadd.f32 %v2003, %v2043
        %v2045 = vpop.f32.mrf.mxu0
        %v2046 = vpop.f32.mrf.mxu0
        %2047 = vdwg.mxu0
        %2048 = vmatprep.subr.bf16.mxu0 %v1433
        %2049 = vmatpush1.bf16.msra.mxu0 %v1432
        %2050 = vmatprep.subr.bf16.mxu0 %v1425
        %2051 = vmatpush1.bf16.msra.mxu0 %v1424
        %2052 = vmatprep.subr.bf16.mxu0 %v1417
        %2053 = vmatpush1.bf16.msra.mxu0 %v1416
        %2054 = vmatprep.subr.bf16.mxu0 %v1409
        %2055 = vmatpush1.bf16.msra.mxu0 %v1408
        %2056 = vmatprep.subr.bf16.mxu0 %v1401
        %2057 = vmatpush1.bf16.msra.mxu0 %v1400
        %2058 = vmatprep.subr.bf16.mxu0 %v1393
        %2059 = vmatpush1.bf16.msra.mxu0 %v1392
        %2060 = vmatprep.subr.bf16.mxu0 %v1385
        %2061 = vmatpush1.bf16.msra.mxu0 %v1384
        %2062 = vmatprep.subr.bf16.mxu0 %v1377
        %2063 = vmatpush1.bf16.msra.mxu0 %v1376
        %2064 = vmatprep.subr.bf16.mxu0 %v1497
        %2065 = vmatpush2.bf16.msra.mxu0 %v1496
        %2066 = vmatprep.subr.bf16.mxu0 %v1489
        %2067 = vmatpush2.bf16.msra.mxu0 %v1488
        %2068 = vmatprep.subr.bf16.mxu0 %v1481
        %2069 = vmatpush2.bf16.msra.mxu0 %v1480
        %2070 = vmatprep.subr.bf16.mxu0 %v1473
        %2071 = vmatpush2.bf16.msra.mxu0 %v1472
        %2072 = vmatprep.subr.bf16.mxu0 %v1465
        %2073 = vmatpush2.bf16.msra.mxu0 %v1464
        %2074 = vmatprep.subr.bf16.mxu0 %v1457
        %2075 = vmatpush2.bf16.msra.mxu0 %v1456
        %2076 = vmatprep.subr.bf16.mxu0 %v1449
        %2077 = vmatpush2.bf16.msra.mxu0 %v1448
        %2078 = vmatprep.subr.bf16.mxu0 %v1441
        %2079 = vmatpush2.bf16.msra.mxu0 %v1440
        %2080 = vmatprep.mubr.bf16.mxu0 %v597
        %2081 = vmatmul.mubr.bf16.gmra.mxu0 %v596
        %v2082 = vpop.f32.mrf.mxu0
        %v2083 = vadd.f32 0.0, %v2082
        %v2084 = vpop.f32.mrf.mxu0
        %v2085 = vadd.f32 0.0, %v2084
        %v2086 = vpop.f32.mrf.mxu0
        %v2087 = vpop.f32.mrf.mxu0
        %2088 = vdwg.mxu0
        %2089 = vmatprep.subr.bf16.mxu0 %v1561
        %2090 = vmatpush1.bf16.msra.mxu0 %v1560
        %2091 = vmatprep.subr.bf16.mxu0 %v1553
        %2092 = vmatpush1.bf16.msra.mxu0 %v1552
        %2093 = vmatprep.subr.bf16.mxu0 %v1545
        %2094 = vmatpush1.bf16.msra.mxu0 %v1544
        %2095 = vmatprep.subr.bf16.mxu0 %v1537
        %2096 = vmatpush1.bf16.msra.mxu0 %v1536
        %2097 = vmatprep.subr.bf16.mxu0 %v1529
        %2098 = vmatpush1.bf16.msra.mxu0 %v1528
        %2099 = vmatprep.subr.bf16.mxu0 %v1521
        %2100 = vmatpush1.bf16.msra.mxu0 %v1520
        %2101 = vmatprep.subr.bf16.mxu0 %v1513
        %2102 = vmatpush1.bf16.msra.mxu0 %v1512
        %2103 = vmatprep.subr.bf16.mxu0 %v1505
        %2104 = vmatpush1.bf16.msra.mxu0 %v1504
        %2105 = vmatprep.subr.bf16.mxu0 %v1625
        %2106 = vmatpush2.bf16.msra.mxu0 %v1624
        %2107 = vmatprep.subr.bf16.mxu0 %v1617
        %2108 = vmatpush2.bf16.msra.mxu0 %v1616
        %2109 = vmatprep.subr.bf16.mxu0 %v1609
        %2110 = vmatpush2.bf16.msra.mxu0 %v1608
        %2111 = vmatprep.subr.bf16.mxu0 %v1601
        %2112 = vmatpush2.bf16.msra.mxu0 %v1600
        %2113 = vmatprep.subr.bf16.mxu0 %v1593
        %2114 = vmatpush2.bf16.msra.mxu0 %v1592
        %2115 = vmatprep.subr.bf16.mxu0 %v1585
        %2116 = vmatpush2.bf16.msra.mxu0 %v1584
        %2117 = vmatprep.subr.bf16.mxu0 %v1577
        %2118 = vmatpush2.bf16.msra.mxu0 %v1576
        %2119 = vmatprep.subr.bf16.mxu0 %v1569
        %2120 = vmatpush2.bf16.msra.mxu0 %v1568
        %2121 = vmatprep.mubr.bf16.mxu0 %v599
        %2122 = vmatmul.mubr.bf16.gmra.mxu0 %v598
        %v2123 = vpop.f32.mrf.mxu0
        %v2124 = vadd.f32 %v2083, %v2123
        %v2125 = vpop.f32.mrf.mxu0
        %v2126 = vadd.f32 %v2085, %v2125
        %v2127 = vpop.f32.mrf.mxu0
        %v2128 = vpop.f32.mrf.mxu0
        %2129 = vdwg.mxu0
        %2130 = vmatprep.subr.bf16.mxu0 %v1435
        %2131 = vmatpush1.bf16.msra.mxu0 %v1434
        %2132 = vmatprep.subr.bf16.mxu0 %v1427
        %2133 = vmatpush1.bf16.msra.mxu0 %v1426
        %2134 = vmatprep.subr.bf16.mxu0 %v1419
        %2135 = vmatpush1.bf16.msra.mxu0 %v1418
        %2136 = vmatprep.subr.bf16.mxu0 %v1411
        %2137 = vmatpush1.bf16.msra.mxu0 %v1410
        %2138 = vmatprep.subr.bf16.mxu0 %v1403
        %2139 = vmatpush1.bf16.msra.mxu0 %v1402
        %2140 = vmatprep.subr.bf16.mxu0 %v1395
        %2141 = vmatpush1.bf16.msra.mxu0 %v1394
        %2142 = vmatprep.subr.bf16.mxu0 %v1387
        %2143 = vmatpush1.bf16.msra.mxu0 %v1386
        %2144 = vmatprep.subr.bf16.mxu0 %v1379
        %2145 = vmatpush1.bf16.msra.mxu0 %v1378
        %2146 = vmatprep.subr.bf16.mxu0 %v1499
        %2147 = vmatpush2.bf16.msra.mxu0 %v1498
        %2148 = vmatprep.subr.bf16.mxu0 %v1491
        %2149 = vmatpush2.bf16.msra.mxu0 %v1490
        %2150 = vmatprep.subr.bf16.mxu0 %v1483
        %2151 = vmatpush2.bf16.msra.mxu0 %v1482
        %2152 = vmatprep.subr.bf16.mxu0 %v1475
        %2153 = vmatpush2.bf16.msra.mxu0 %v1474
        %2154 = vmatprep.subr.bf16.mxu0 %v1467
        %2155 = vmatpush2.bf16.msra.mxu0 %v1466
        %2156 = vmatprep.subr.bf16.mxu0 %v1459
        %2157 = vmatpush2.bf16.msra.mxu0 %v1458
        %2158 = vmatprep.subr.bf16.mxu0 %v1451
        %2159 = vmatpush2.bf16.msra.mxu0 %v1450
        %2160 = vmatprep.subr.bf16.mxu0 %v1443
        %2161 = vmatpush2.bf16.msra.mxu0 %v1442
        %2162 = vmatprep.mubr.bf16.mxu0 %v597
        %2163 = vmatmul.mubr.bf16.gmra.mxu0 %v596
        %v2164 = vpop.f32.mrf.mxu0
        %v2165 = vadd.f32 0.0, %v2164
        %v2166 = vpop.f32.mrf.mxu0
        %v2167 = vadd.f32 0.0, %v2166
        %v2168 = vpop.f32.mrf.mxu0
        %v2169 = vpop.f32.mrf.mxu0
        %2170 = vdwg.mxu0
        %2171 = vmatprep.subr.bf16.mxu0 %v1563
        %2172 = vmatpush1.bf16.msra.mxu0 %v1562
        %2173 = vmatprep.subr.bf16.mxu0 %v1555
        %2174 = vmatpush1.bf16.msra.mxu0 %v1554
        %2175 = vmatprep.subr.bf16.mxu0 %v1547
        %2176 = vmatpush1.bf16.msra.mxu0 %v1546
        %2177 = vmatprep.subr.bf16.mxu0 %v1539
        %2178 = vmatpush1.bf16.msra.mxu0 %v1538
        %2179 = vmatprep.subr.bf16.mxu0 %v1531
        %2180 = vmatpush1.bf16.msra.mxu0 %v1530
        %2181 = vmatprep.subr.bf16.mxu0 %v1523
        %2182 = vmatpush1.bf16.msra.mxu0 %v1522
        %2183 = vmatprep.subr.bf16.mxu0 %v1515
        %2184 = vmatpush1.bf16.msra.mxu0 %v1514
        %2185 = vmatprep.subr.bf16.mxu0 %v1507
        %2186 = vmatpush1.bf16.msra.mxu0 %v1506
        %2187 = vmatprep.subr.bf16.mxu0 %v1627
        %2188 = vmatpush2.bf16.msra.mxu0 %v1626
        %2189 = vmatprep.subr.bf16.mxu0 %v1619
        %2190 = vmatpush2.bf16.msra.mxu0 %v1618
        %2191 = vmatprep.subr.bf16.mxu0 %v1611
        %2192 = vmatpush2.bf16.msra.mxu0 %v1610
        %2193 = vmatprep.subr.bf16.mxu0 %v1603
        %2194 = vmatpush2.bf16.msra.mxu0 %v1602
        %2195 = vmatprep.subr.bf16.mxu0 %v1595
        %2196 = vmatpush2.bf16.msra.mxu0 %v1594
        %2197 = vmatprep.subr.bf16.mxu0 %v1587
        %2198 = vmatpush2.bf16.msra.mxu0 %v1586
        %2199 = vmatprep.subr.bf16.mxu0 %v1579
        %2200 = vmatpush2.bf16.msra.mxu0 %v1578
        %2201 = vmatprep.subr.bf16.mxu0 %v1571
        %2202 = vmatpush2.bf16.msra.mxu0 %v1570
        %2203 = vmatprep.mubr.bf16.mxu0 %v599
        %2204 = vmatmul.mubr.bf16.gmra.mxu0 %v598
        %v2205 = vpop.f32.mrf.mxu0
        %v2206 = vadd.f32 %v2165, %v2205
        %v2207 = vpop.f32.mrf.mxu0
        %v2208 = vadd.f32 %v2167, %v2207
        %v2209 = vpop.f32.mrf.mxu0
        %v2210 = vpop.f32.mrf.mxu0
        %2211 = vdwg.mxu0
        %v2212 = vadd.f32 %v324, %v1960
        %v2213 = vadd.f32 %v325, %v1962
        %v2214 = vadd.f32 %v326, %v2042
        %v2215 = vadd.f32 %v327, %v2044
        %v2216 = vadd.f32 %v328, %v2124
        %v2217 = vadd.f32 %v329, %v2126
        %v2218 = vadd.f32 %v330, %v2206
        %v2219 = vadd.f32 %v331, %v2208
        %2220 = vst [vmem:[#allocation2] sm:$0xff] %v2212
        %2221 = vst [vmem:[#allocation2 + $0x8] sm:$0xff] %v2213
        %2222 = vst [vmem:[#allocation2 + $0x10] sm:$0xff] %v2214
        %2223 = vst [vmem:[#allocation2 + $0x18] sm:$0xff] %v2215
        %2224 = vst [vmem:[#allocation2 + $0x20] sm:$0xff] %v2216
        %2225 = vst [vmem:[#allocation2 + $0x28] sm:$0xff] %v2217
        %2226 = vst [vmem:[#allocation2 + $0x30] sm:$0xff] %v2218
        %2227 = vst [vmem:[#allocation2 + $0x38] sm:$0xff] %v2219
        %p2228 = scmp.eq.s32.totalorder %s24, 1
        // Predicated region
        $region65: #{tpu_custom_call.1} parent=39 // pred_check
          %p2229 = pneg %p2228
        $region66: #{tpu_custom_call.1} parent=39 // pred_check_branch
          %2231 = sbr.rel (%p2229) target = $region68
        $region67: #{tpu_custom_call.1} parent=39 // pred_region
          %v2232 = vld [vmem:[#allocation2] sm:$0xff]
          %v2233 = vld [vmem:[#allocation2 + $0x8] sm:$0xff]
          %v2234 = vld [vmem:[#allocation2 + $0x10] sm:$0xff]
          %v2235 = vld [vmem:[#allocation2 + $0x18] sm:$0xff]
          %v2236 = vld [vmem:[#allocation2 + $0x20] sm:$0xff]
          %v2237 = vld [vmem:[#allocation2 + $0x28] sm:$0xff]
          %v2238 = vld [vmem:[#allocation2 + $0x30] sm:$0xff]
          %v2239 = vld [vmem:[#allocation2 + $0x38] sm:$0xff]
          %v2240 = vld [vmem:[#allocation8] sm:$0xff]
          %v2242 = vlaneseq
          %v2243 = vshrl.u32 %v2242, 7
          %v2244 = vsub.s32 0, %v2243
          %v2245 = vrot.slane %v2240, %v2244
          %v2246 = vlaneseq
          %v2247 = vshrl.u32 %v2246, 7
          %v2248 = vsub.s32 1, %v2247
          %v2249 = vrot.slane %v2240, %v2248
          %v2250 = vlaneseq
          %v2251 = vshrl.u32 %v2250, 7
          %v2252 = vsub.s32 2, %v2251
          %v2253 = vrot.slane %v2240, %v2252
          %v2254 = vlaneseq
          %v2255 = vshrl.u32 %v2254, 7
          %v2256 = vsub.s32 3, %v2255
          %v2257 = vrot.slane %v2240, %v2256
          %v2258 = vlaneseq
          %v2259 = vshrl.u32 %v2258, 7
          %v2260 = vsub.s32 4, %v2259
          %v2261 = vrot.slane %v2240, %v2260
          %v2262 = vlaneseq
          %v2263 = vshrl.u32 %v2262, 7
          %v2264 = vsub.s32 5, %v2263
          %v2265 = vrot.slane %v2240, %v2264
          %v2266 = vlaneseq
          %v2267 = vshrl.u32 %v2266, 7
          %v2268 = vsub.s32 6, %v2267
          %v2269 = vrot.slane %v2240, %v2268
          %v2270 = vlaneseq
          %v2271 = vshrl.u32 %v2270, 7
          %v2272 = vsub.s32 7, %v2271
          %v2273 = vrot.slane %v2240, %v2272
          %v2282 = vadd.f32 %v2232, %v2245
          %v2283 = vadd.f32 %v2233, %v2249
          %v2284 = vadd.f32 %v2234, %v2253
          %v2285 = vadd.f32 %v2235, %v2257
          %v2286 = vadd.f32 %v2236, %v2261
          %v2287 = vadd.f32 %v2237, %v2265
          %v2288 = vadd.f32 %v2238, %v2269
          %v2289 = vadd.f32 %v2239, %v2273
          %v2290 = vtanh.pop %v2282
          %v2291 = vtanh.pop %v2283
          %v2292 = vtanh.pop %v2284
          %v2293 = vtanh.pop %v2285
          %v2294 = vtanh.pop %v2286
          %v2295 = vtanh.pop %v2287
          %v2296 = vtanh.pop %v2288
          %v2297 = vtanh.pop %v2289
          %v2298 = vpack.c.bf16 %v2290, %v2290
          %v2299 = vpack.c.bf16 %v2291, %v2291
          %v2300 = vpack.c.bf16 %v2292, %v2292
          %v2301 = vpack.c.bf16 %v2293, %v2293
          %v2302 = vpack.c.bf16 %v2294, %v2294
          %v2303 = vpack.c.bf16 %v2295, %v2295
          %v2304 = vpack.c.bf16 %v2296, %v2296
          %v2305 = vpack.c.bf16 %v2297, %v2297
          %v2306 = vld [vmem:[#allocation9] sm:$0xf]
          %v2307 = vld [vmem:[#allocation9 + $0x4] sm:$0xf]
          %v2308 = vld [vmem:[#allocation9 + $0x8] sm:$0xf]
          %v2309 = vld [vmem:[#allocation9 + $0xc] sm:$0xf]
          %v2310 = vld [vmem:[#allocation9 + $0x10] sm:$0xf]
          %v2311 = vld [vmem:[#allocation9 + $0x14] sm:$0xf]
          %v2312 = vld [vmem:[#allocation9 + $0x18] sm:$0xf]
          %v2313 = vld [vmem:[#allocation9 + $0x1c] sm:$0xf]
          %v2314 = vld [vmem:[#allocation9 + $0x20] sm:$0xf]
          %v2315 = vld [vmem:[#allocation9 + $0x24] sm:$0xf]
          %v2316 = vld [vmem:[#allocation9 + $0x28] sm:$0xf]
          %v2317 = vld [vmem:[#allocation9 + $0x2c] sm:$0xf]
          %v2318 = vld [vmem:[#allocation9 + $0x30] sm:$0xf]
          %v2319 = vld [vmem:[#allocation9 + $0x34] sm:$0xf]
          %v2320 = vld [vmem:[#allocation9 + $0x38] sm:$0xf]
          %v2321 = vld [vmem:[#allocation9 + $0x3c] sm:$0xf]
          %v2322 = vld [vmem:[#allocation9 + $0x40] sm:$0xf]
          %v2323 = vld [vmem:[#allocation9 + $0x44] sm:$0xf]
          %v2324 = vld [vmem:[#allocation9 + $0x48] sm:$0xf]
          %v2325 = vld [vmem:[#allocation9 + $0x4c] sm:$0xf]
          %v2326 = vld [vmem:[#allocation9 + $0x50] sm:$0xf]
          %v2327 = vld [vmem:[#allocation9 + $0x54] sm:$0xf]
          %v2328 = vld [vmem:[#allocation9 + $0x58] sm:$0xf]
          %v2329 = vld [vmem:[#allocation9 + $0x5c] sm:$0xf]
          %v2330 = vld [vmem:[#allocation9 + $0x60] sm:$0xf]
          %v2331 = vld [vmem:[#allocation9 + $0x64] sm:$0xf]
          %v2332 = vld [vmem:[#allocation9 + $0x68] sm:$0xf]
          %v2333 = vld [vmem:[#allocation9 + $0x6c] sm:$0xf]
          %v2334 = vld [vmem:[#allocation9 + $0x70] sm:$0xf]
          %v2335 = vld [vmem:[#allocation9 + $0x74] sm:$0xf]
          %v2336 = vld [vmem:[#allocation9 + $0x78] sm:$0xf]
          %v2337 = vld [vmem:[#allocation9 + $0x7c] sm:$0xf]
          %v2338 = vld [vmem:[#allocation9 + $0x80] sm:$0xf]
          %v2339 = vld [vmem:[#allocation9 + $0x84] sm:$0xf]
          %v2340 = vld [vmem:[#allocation9 + $0x88] sm:$0xf]
          %v2341 = vld [vmem:[#allocation9 + $0x8c] sm:$0xf]
          %v2342 = vld [vmem:[#allocation9 + $0x90] sm:$0xf]
          %v2343 = vld [vmem:[#allocation9 + $0x94] sm:$0xf]
          %v2344 = vld [vmem:[#allocation9 + $0x98] sm:$0xf]
          %v2345 = vld [vmem:[#allocation9 + $0x9c] sm:$0xf]
          %v2346 = vld [vmem:[#allocation9 + $0xa0] sm:$0xf]
          %v2347 = vld [vmem:[#allocation9 + $0xa4] sm:$0xf]
          %v2348 = vld [vmem:[#allocation9 + $0xa8] sm:$0xf]
          %v2349 = vld [vmem:[#allocation9 + $0xac] sm:$0xf]
          %v2350 = vld [vmem:[#allocation9 + $0xb0] sm:$0xf]
          %v2351 = vld [vmem:[#allocation9 + $0xb4] sm:$0xf]
          %v2352 = vld [vmem:[#allocation9 + $0xb8] sm:$0xf]
          %v2353 = vld [vmem:[#allocation9 + $0xbc] sm:$0xf]
          %v2354 = vld [vmem:[#allocation9 + $0xc0] sm:$0xf]
          %v2355 = vld [vmem:[#allocation9 + $0xc4] sm:$0xf]
          %v2356 = vld [vmem:[#allocation9 + $0xc8] sm:$0xf]
          %v2357 = vld [vmem:[#allocation9 + $0xcc] sm:$0xf]
          %v2358 = vld [vmem:[#allocation9 + $0xd0] sm:$0xf]
          %v2359 = vld [vmem:[#allocation9 + $0xd4] sm:$0xf]
          %v2360 = vld [vmem:[#allocation9 + $0xd8] sm:$0xf]
          %v2361 = vld [vmem:[#allocation9 + $0xdc] sm:$0xf]
          %v2362 = vld [vmem:[#allocation9 + $0xe0] sm:$0xf]
          %v2363 = vld [vmem:[#allocation9 + $0xe4] sm:$0xf]
          %v2364 = vld [vmem:[#allocation9 + $0xe8] sm:$0xf]
          %v2365 = vld [vmem:[#allocation9 + $0xec] sm:$0xf]
          %v2366 = vld [vmem:[#allocation9 + $0xf0] sm:$0xf]
          %v2367 = vld [vmem:[#allocation9 + $0xf4] sm:$0xf]
          %v2368 = vld [vmem:[#allocation9 + $0xf8] sm:$0xf]
          %v2369 = vld [vmem:[#allocation9 + $0xfc] sm:$0xf]
          %v2370 = vld [vmem:[#allocation9 + $0x100] sm:$0xf]
          %v2371 = vld [vmem:[#allocation9 + $0x104] sm:$0xf]
          %v2372 = vld [vmem:[#allocation9 + $0x108] sm:$0xf]
          %v2373 = vld [vmem:[#allocation9 + $0x10c] sm:$0xf]
          %v2374 = vld [vmem:[#allocation9 + $0x110] sm:$0xf]
          %v2375 = vld [vmem:[#allocation9 + $0x114] sm:$0xf]
          %v2376 = vld [vmem:[#allocation9 + $0x118] sm:$0xf]
          %v2377 = vld [vmem:[#allocation9 + $0x11c] sm:$0xf]
          %v2378 = vld [vmem:[#allocation9 + $0x120] sm:$0xf]
          %v2379 = vld [vmem:[#allocation9 + $0x124] sm:$0xf]
          %v2380 = vld [vmem:[#allocation9 + $0x128] sm:$0xf]
          %v2381 = vld [vmem:[#allocation9 + $0x12c] sm:$0xf]
          %v2382 = vld [vmem:[#allocation9 + $0x130] sm:$0xf]
          %v2383 = vld [vmem:[#allocation9 + $0x134] sm:$0xf]
          %v2384 = vld [vmem:[#allocation9 + $0x138] sm:$0xf]
          %v2385 = vld [vmem:[#allocation9 + $0x13c] sm:$0xf]
          %v2386 = vld [vmem:[#allocation9 + $0x140] sm:$0xf]
          %v2387 = vld [vmem:[#allocation9 + $0x144] sm:$0xf]
          %v2388 = vld [vmem:[#allocation9 + $0x148] sm:$0xf]
          %v2389 = vld [vmem:[#allocation9 + $0x14c] sm:$0xf]
          %v2390 = vld [vmem:[#allocation9 + $0x150] sm:$0xf]
          %v2391 = vld [vmem:[#allocation9 + $0x154] sm:$0xf]
          %v2392 = vld [vmem:[#allocation9 + $0x158] sm:$0xf]
          %v2393 = vld [vmem:[#allocation9 + $0x15c] sm:$0xf]
          %v2394 = vld [vmem:[#allocation9 + $0x160] sm:$0xf]
          %v2395 = vld [vmem:[#allocation9 + $0x164] sm:$0xf]
          %v2396 = vld [vmem:[#allocation9 + $0x168] sm:$0xf]
          %v2397 = vld [vmem:[#allocation9 + $0x16c] sm:$0xf]
          %v2398 = vld [vmem:[#allocation9 + $0x170] sm:$0xf]
          %v2399 = vld [vmem:[#allocation9 + $0x174] sm:$0xf]
          %v2400 = vld [vmem:[#allocation9 + $0x178] sm:$0xf]
          %v2401 = vld [vmem:[#allocation9 + $0x17c] sm:$0xf]
          %v2402 = vld [vmem:[#allocation9 + $0x180] sm:$0xf]
          %v2403 = vld [vmem:[#allocation9 + $0x184] sm:$0xf]
          %v2404 = vld [vmem:[#allocation9 + $0x188] sm:$0xf]
          %v2405 = vld [vmem:[#allocation9 + $0x18c] sm:$0xf]
          %v2406 = vld [vmem:[#allocation9 + $0x190] sm:$0xf]
          %v2407 = vld [vmem:[#allocation9 + $0x194] sm:$0xf]
          %v2408 = vld [vmem:[#allocation9 + $0x198] sm:$0xf]
          %v2409 = vld [vmem:[#allocation9 + $0x19c] sm:$0xf]
          %v2410 = vld [vmem:[#allocation9 + $0x1a0] sm:$0xf]
          %v2411 = vld [vmem:[#allocation9 + $0x1a4] sm:$0xf]
          %v2412 = vld [vmem:[#allocation9 + $0x1a8] sm:$0xf]
          %v2413 = vld [vmem:[#allocation9 + $0x1ac] sm:$0xf]
          %v2414 = vld [vmem:[#allocation9 + $0x1b0] sm:$0xf]
          %v2415 = vld [vmem:[#allocation9 + $0x1b4] sm:$0xf]
          %v2416 = vld [vmem:[#allocation9 + $0x1b8] sm:$0xf]
          %v2417 = vld [vmem:[#allocation9 + $0x1bc] sm:$0xf]
          %v2418 = vld [vmem:[#allocation9 + $0x1c0] sm:$0xf]
          %v2419 = vld [vmem:[#allocation9 + $0x1c4] sm:$0xf]
          %v2420 = vld [vmem:[#allocation9 + $0x1c8] sm:$0xf]
          %v2421 = vld [vmem:[#allocation9 + $0x1cc] sm:$0xf]
          %v2422 = vld [vmem:[#allocation9 + $0x1d0] sm:$0xf]
          %v2423 = vld [vmem:[#allocation9 + $0x1d4] sm:$0xf]
          %v2424 = vld [vmem:[#allocation9 + $0x1d8] sm:$0xf]
          %v2425 = vld [vmem:[#allocation9 + $0x1dc] sm:$0xf]
          %v2426 = vld [vmem:[#allocation9 + $0x1e0] sm:$0xf]
          %v2427 = vld [vmem:[#allocation9 + $0x1e4] sm:$0xf]
          %v2428 = vld [vmem:[#allocation9 + $0x1e8] sm:$0xf]
          %v2429 = vld [vmem:[#allocation9 + $0x1ec] sm:$0xf]
          %v2430 = vld [vmem:[#allocation9 + $0x1f0] sm:$0xf]
          %v2431 = vld [vmem:[#allocation9 + $0x1f4] sm:$0xf]
          %v2432 = vld [vmem:[#allocation9 + $0x1f8] sm:$0xf]
          %v2433 = vld [vmem:[#allocation9 + $0x1fc] sm:$0xf]
          %v2434 = vld [vmem:[#allocation11] sm:$0x1]
          %v2436 = vlaneseq
          %v2437 = vshrl.u32 %v2436, 7
          %v2438 = vsub.s32 0, %v2437
          %v2439 = vrot.slane %v2434, %v2438
          %v2569 = vunpack.c.l.b16 %v2306
          %v2570 = vunpack.c.l.b16 %v2307
          %v2571 = vunpack.c.l.b16 %v2308
          %v2572 = vunpack.c.l.b16 %v2309
          %v2573 = vunpack.c.l.b16 %v2310
          %v2574 = vunpack.c.l.b16 %v2311
          %v2575 = vunpack.c.l.b16 %v2312
          %v2576 = vunpack.c.l.b16 %v2313
          %v2577 = vunpack.c.l.b16 %v2314
          %v2578 = vunpack.c.l.b16 %v2315
          %v2579 = vunpack.c.l.b16 %v2316
          %v2580 = vunpack.c.l.b16 %v2317
          %v2581 = vunpack.c.l.b16 %v2318
          %v2582 = vunpack.c.l.b16 %v2319
          %v2583 = vunpack.c.l.b16 %v2320
          %v2584 = vunpack.c.l.b16 %v2321
          %v2585 = vunpack.c.l.b16 %v2322
          %v2586 = vunpack.c.l.b16 %v2323
          %v2587 = vunpack.c.l.b16 %v2324
          %v2588 = vunpack.c.l.b16 %v2325
          %v2589 = vunpack.c.l.b16 %v2326
          %v2590 = vunpack.c.l.b16 %v2327
          %v2591 = vunpack.c.l.b16 %v2328
          %v2592 = vunpack.c.l.b16 %v2329
          %v2593 = vunpack.c.l.b16 %v2330
          %v2594 = vunpack.c.l.b16 %v2331
          %v2595 = vunpack.c.l.b16 %v2332
          %v2596 = vunpack.c.l.b16 %v2333
          %v2597 = vunpack.c.l.b16 %v2334
          %v2598 = vunpack.c.l.b16 %v2335
          %v2599 = vunpack.c.l.b16 %v2336
          %v2600 = vunpack.c.l.b16 %v2337
          %v2601 = vunpack.c.l.b16 %v2338
          %v2602 = vunpack.c.l.b16 %v2339
          %v2603 = vunpack.c.l.b16 %v2340
          %v2604 = vunpack.c.l.b16 %v2341
          %v2605 = vunpack.c.l.b16 %v2342
          %v2606 = vunpack.c.l.b16 %v2343
          %v2607 = vunpack.c.l.b16 %v2344
          %v2608 = vunpack.c.l.b16 %v2345
          %v2609 = vunpack.c.l.b16 %v2346
          %v2610 = vunpack.c.l.b16 %v2347
          %v2611 = vunpack.c.l.b16 %v2348
          %v2612 = vunpack.c.l.b16 %v2349
          %v2613 = vunpack.c.l.b16 %v2350
          %v2614 = vunpack.c.l.b16 %v2351
          %v2615 = vunpack.c.l.b16 %v2352
          %v2616 = vunpack.c.l.b16 %v2353
          %v2617 = vunpack.c.l.b16 %v2354
          %v2618 = vunpack.c.l.b16 %v2355
          %v2619 = vunpack.c.l.b16 %v2356
          %v2620 = vunpack.c.l.b16 %v2357
          %v2621 = vunpack.c.l.b16 %v2358
          %v2622 = vunpack.c.l.b16 %v2359
          %v2623 = vunpack.c.l.b16 %v2360
          %v2624 = vunpack.c.l.b16 %v2361
          %v2625 = vunpack.c.l.b16 %v2362
          %v2626 = vunpack.c.l.b16 %v2363
          %v2627 = vunpack.c.l.b16 %v2364
          %v2628 = vunpack.c.l.b16 %v2365
          %v2629 = vunpack.c.l.b16 %v2366
          %v2630 = vunpack.c.l.b16 %v2367
          %v2631 = vunpack.c.l.b16 %v2368
          %v2632 = vunpack.c.l.b16 %v2369
          %v2633 = vunpack.c.l.b16 %v2370
          %v2634 = vunpack.c.l.b16 %v2371
          %v2635 = vunpack.c.l.b16 %v2372
          %v2636 = vunpack.c.l.b16 %v2373
          %v2637 = vunpack.c.l.b16 %v2374
          %v2638 = vunpack.c.l.b16 %v2375
          %v2639 = vunpack.c.l.b16 %v2376
          %v2640 = vunpack.c.l.b16 %v2377
          %v2641 = vunpack.c.l.b16 %v2378
          %v2642 = vunpack.c.l.b16 %v2379
          %v2643 = vunpack.c.l.b16 %v2380
          %v2644 = vunpack.c.l.b16 %v2381
          %v2645 = vunpack.c.l.b16 %v2382
          %v2646 = vunpack.c.l.b16 %v2383
          %v2647 = vunpack.c.l.b16 %v2384
          %v2648 = vunpack.c.l.b16 %v2385
          %v2649 = vunpack.c.l.b16 %v2386
          %v2650 = vunpack.c.l.b16 %v2387
          %v2651 = vunpack.c.l.b16 %v2388
          %v2652 = vunpack.c.l.b16 %v2389
          %v2653 = vunpack.c.l.b16 %v2390
          %v2654 = vunpack.c.l.b16 %v2391
          %v2655 = vunpack.c.l.b16 %v2392
          %v2656 = vunpack.c.l.b16 %v2393
          %v2657 = vunpack.c.l.b16 %v2394
          %v2658 = vunpack.c.l.b16 %v2395
          %v2659 = vunpack.c.l.b16 %v2396
          %v2660 = vunpack.c.l.b16 %v2397
          %v2661 = vunpack.c.l.b16 %v2398
          %v2662 = vunpack.c.l.b16 %v2399
          %v2663 = vunpack.c.l.b16 %v2400
          %v2664 = vunpack.c.l.b16 %v2401
          %v2665 = vunpack.c.l.b16 %v2402
          %v2666 = vunpack.c.l.b16 %v2403
          %v2667 = vunpack.c.l.b16 %v2404
          %v2668 = vunpack.c.l.b16 %v2405
          %v2669 = vunpack.c.l.b16 %v2406
          %v2670 = vunpack.c.l.b16 %v2407
          %v2671 = vunpack.c.l.b16 %v2408
          %v2672 = vunpack.c.l.b16 %v2409
          %v2673 = vunpack.c.l.b16 %v2410
          %v2674 = vunpack.c.l.b16 %v2411
          %v2675 = vunpack.c.l.b16 %v2412
          %v2676 = vunpack.c.l.b16 %v2413
          %v2677 = vunpack.c.l.b16 %v2414
          %v2678 = vunpack.c.l.b16 %v2415
          %v2679 = vunpack.c.l.b16 %v2416
          %v2680 = vunpack.c.l.b16 %v2417
          %v2681 = vunpack.c.l.b16 %v2418
          %v2682 = vunpack.c.l.b16 %v2419
          %v2683 = vunpack.c.l.b16 %v2420
          %v2684 = vunpack.c.l.b16 %v2421
          %v2685 = vunpack.c.l.b16 %v2422
          %v2686 = vunpack.c.l.b16 %v2423
          %v2687 = vunpack.c.l.b16 %v2424
          %v2688 = vunpack.c.l.b16 %v2425
          %v2689 = vunpack.c.l.b16 %v2426
          %v2690 = vunpack.c.l.b16 %v2427
          %v2691 = vunpack.c.l.b16 %v2428
          %v2692 = vunpack.c.l.b16 %v2429
          %v2693 = vunpack.c.l.b16 %v2430
          %v2694 = vunpack.c.l.b16 %v2431
          %v2695 = vunpack.c.l.b16 %v2432
          %v2696 = vunpack.c.l.b16 %v2433
          %v2697 = vpack.c.b16 %v2570, %v2569
          %v2698 = vpack.c.b16 %v2572, %v2571
          %v2699 = vpack.c.b16 %v2574, %v2573
          %v2700 = vpack.c.b16 %v2576, %v2575
          %v2701 = vpack.c.b16 %v2578, %v2577
          %v2702 = vpack.c.b16 %v2580, %v2579
          %v2703 = vpack.c.b16 %v2582, %v2581
          %v2704 = vpack.c.b16 %v2584, %v2583
          %v2705 = vpack.c.b16 %v2586, %v2585
          %v2706 = vpack.c.b16 %v2588, %v2587
          %v2707 = vpack.c.b16 %v2590, %v2589
          %v2708 = vpack.c.b16 %v2592, %v2591
          %v2709 = vpack.c.b16 %v2594, %v2593
          %v2710 = vpack.c.b16 %v2596, %v2595
          %v2711 = vpack.c.b16 %v2598, %v2597
          %v2712 = vpack.c.b16 %v2600, %v2599
          %v2713 = vpack.c.b16 %v2602, %v2601
          %v2714 = vpack.c.b16 %v2604, %v2603
          %v2715 = vpack.c.b16 %v2606, %v2605
          %v2716 = vpack.c.b16 %v2608, %v2607
          %v2717 = vpack.c.b16 %v2610, %v2609
          %v2718 = vpack.c.b16 %v2612, %v2611
          %v2719 = vpack.c.b16 %v2614, %v2613
          %v2720 = vpack.c.b16 %v2616, %v2615
          %v2721 = vpack.c.b16 %v2618, %v2617
          %v2722 = vpack.c.b16 %v2620, %v2619
          %v2723 = vpack.c.b16 %v2622, %v2621
          %v2724 = vpack.c.b16 %v2624, %v2623
          %v2725 = vpack.c.b16 %v2626, %v2625
          %v2726 = vpack.c.b16 %v2628, %v2627
          %v2727 = vpack.c.b16 %v2630, %v2629
          %v2728 = vpack.c.b16 %v2632, %v2631
          %v2729 = vpack.c.b16 %v2634, %v2633
          %v2730 = vpack.c.b16 %v2636, %v2635
          %v2731 = vpack.c.b16 %v2638, %v2637
          %v2732 = vpack.c.b16 %v2640, %v2639
          %v2733 = vpack.c.b16 %v2642, %v2641
          %v2734 = vpack.c.b16 %v2644, %v2643
          %v2735 = vpack.c.b16 %v2646, %v2645
          %v2736 = vpack.c.b16 %v2648, %v2647
          %v2737 = vpack.c.b16 %v2650, %v2649
          %v2738 = vpack.c.b16 %v2652, %v2651
          %v2739 = vpack.c.b16 %v2654, %v2653
          %v2740 = vpack.c.b16 %v2656, %v2655
          %v2741 = vpack.c.b16 %v2658, %v2657
          %v2742 = vpack.c.b16 %v2660, %v2659
          %v2743 = vpack.c.b16 %v2662, %v2661
          %v2744 = vpack.c.b16 %v2664, %v2663
          %v2745 = vpack.c.b16 %v2666, %v2665
          %v2746 = vpack.c.b16 %v2668, %v2667
          %v2747 = vpack.c.b16 %v2670, %v2669
          %v2748 = vpack.c.b16 %v2672, %v2671
          %v2749 = vpack.c.b16 %v2674, %v2673
          %v2750 = vpack.c.b16 %v2676, %v2675
          %v2751 = vpack.c.b16 %v2678, %v2677
          %v2752 = vpack.c.b16 %v2680, %v2679
          %v2753 = vpack.c.b16 %v2682, %v2681
          %v2754 = vpack.c.b16 %v2684, %v2683
          %v2755 = vpack.c.b16 %v2686, %v2685
          %v2756 = vpack.c.b16 %v2688, %v2687
          %v2757 = vpack.c.b16 %v2690, %v2689
          %v2758 = vpack.c.b16 %v2692, %v2691
          %v2759 = vpack.c.b16 %v2694, %v2693
          %v2760 = vpack.c.b16 %v2696, %v2695
          %2825 = vmatprep.subr.bf16.mxu0 0
          %2826 = vmatpush1.bf16.msra.mxu0 %v2704
          %2827 = vmatprep.subr.bf16.mxu0 0
          %2828 = vmatpush1.bf16.msra.mxu0 %v2703
          %2829 = vmatprep.subr.bf16.mxu0 0
          %2830 = vmatpush1.bf16.msra.mxu0 %v2702
          %2831 = vmatprep.subr.bf16.mxu0 0
          %2832 = vmatpush1.bf16.msra.mxu0 %v2701
          %2833 = vmatprep.subr.bf16.mxu0 0
          %2834 = vmatpush1.bf16.msra.mxu0 %v2700
          %2835 = vmatprep.subr.bf16.mxu0 0
          %2836 = vmatpush1.bf16.msra.mxu0 %v2699
          %2837 = vmatprep.subr.bf16.mxu0 0
          %2838 = vmatpush1.bf16.msra.mxu0 %v2698
          %2839 = vmatprep.subr.bf16.mxu0 0
          %2840 = vmatpush1.bf16.msra.mxu0 %v2697
          %2841 = vmatprep.subr.bf16.mxu0 0
          %2842 = vmatpush2.bf16.msra.mxu0 %v2712
          %2843 = vmatprep.subr.bf16.mxu0 0
          %2844 = vmatpush2.bf16.msra.mxu0 %v2711
          %2845 = vmatprep.subr.bf16.mxu0 0
          %2846 = vmatpush2.bf16.msra.mxu0 %v2710
          %2847 = vmatprep.subr.bf16.mxu0 0
          %2848 = vmatpush2.bf16.msra.mxu0 %v2709
          %2849 = vmatprep.subr.bf16.mxu0 0
          %2850 = vmatpush2.bf16.msra.mxu0 %v2708
          %2851 = vmatprep.subr.bf16.mxu0 0
          %2852 = vmatpush2.bf16.msra.mxu0 %v2707
          %2853 = vmatprep.subr.bf16.mxu0 0
          %2854 = vmatpush2.bf16.msra.mxu0 %v2706
          %2855 = vmatprep.subr.bf16.mxu0 0
          %2856 = vmatpush2.bf16.msra.mxu0 %v2705
          %2857 = vmatprep.mubr.bf16.mxu0 %v2299
          %2858 = vmatmul.mubr.bf16.gmra.mxu0 %v2298
          %v2859 = vpop.f32.mrf.mxu0
          %v2860 = vadd.f32 %v2439, %v2859
          %v2861 = vpop.f32.mrf.mxu0
          %v2862 = vpop.f32.mrf.mxu0
          %v2863 = vpop.f32.mrf.mxu0
          %2864 = vdwg.mxu0
          %2865 = vmatprep.subr.bf16.mxu0 0
          %2866 = vmatpush1.bf16.msra.mxu0 %v2720
          %2867 = vmatprep.subr.bf16.mxu0 0
          %2868 = vmatpush1.bf16.msra.mxu0 %v2719
          %2869 = vmatprep.subr.bf16.mxu0 0
          %2870 = vmatpush1.bf16.msra.mxu0 %v2718
          %2871 = vmatprep.subr.bf16.mxu0 0
          %2872 = vmatpush1.bf16.msra.mxu0 %v2717
          %2873 = vmatprep.subr.bf16.mxu0 0
          %2874 = vmatpush1.bf16.msra.mxu0 %v2716
          %2875 = vmatprep.subr.bf16.mxu0 0
          %2876 = vmatpush1.bf16.msra.mxu0 %v2715
          %2877 = vmatprep.subr.bf16.mxu0 0
          %2878 = vmatpush1.bf16.msra.mxu0 %v2714
          %2879 = vmatprep.subr.bf16.mxu0 0
          %2880 = vmatpush1.bf16.msra.mxu0 %v2713
          %2881 = vmatprep.subr.bf16.mxu0 0
          %2882 = vmatpush2.bf16.msra.mxu0 %v2728
          %2883 = vmatprep.subr.bf16.mxu0 0
          %2884 = vmatpush2.bf16.msra.mxu0 %v2727
          %2885 = vmatprep.subr.bf16.mxu0 0
          %2886 = vmatpush2.bf16.msra.mxu0 %v2726
          %2887 = vmatprep.subr.bf16.mxu0 0
          %2888 = vmatpush2.bf16.msra.mxu0 %v2725
          %2889 = vmatprep.subr.bf16.mxu0 0
          %2890 = vmatpush2.bf16.msra.mxu0 %v2724
          %2891 = vmatprep.subr.bf16.mxu0 0
          %2892 = vmatpush2.bf16.msra.mxu0 %v2723
          %2893 = vmatprep.subr.bf16.mxu0 0
          %2894 = vmatpush2.bf16.msra.mxu0 %v2722
          %2895 = vmatprep.subr.bf16.mxu0 0
          %2896 = vmatpush2.bf16.msra.mxu0 %v2721
          %2897 = vmatprep.mubr.bf16.mxu0 %v2301
          %2898 = vmatmul.mubr.bf16.gmra.mxu0 %v2300
          %v2899 = vpop.f32.mrf.mxu0
          %v2900 = vadd.f32 %v2860, %v2899
          %v2901 = vpop.f32.mrf.mxu0
          %v2902 = vpop.f32.mrf.mxu0
          %v2903 = vpop.f32.mrf.mxu0
          %2904 = vdwg.mxu0
          %2905 = vmatprep.subr.bf16.mxu0 0
          %2906 = vmatpush1.bf16.msra.mxu0 %v2736
          %2907 = vmatprep.subr.bf16.mxu0 0
          %2908 = vmatpush1.bf16.msra.mxu0 %v2735
          %2909 = vmatprep.subr.bf16.mxu0 0
          %2910 = vmatpush1.bf16.msra.mxu0 %v2734
          %2911 = vmatprep.subr.bf16.mxu0 0
          %2912 = vmatpush1.bf16.msra.mxu0 %v2733
          %2913 = vmatprep.subr.bf16.mxu0 0
          %2914 = vmatpush1.bf16.msra.mxu0 %v2732
          %2915 = vmatprep.subr.bf16.mxu0 0
          %2916 = vmatpush1.bf16.msra.mxu0 %v2731
          %2917 = vmatprep.subr.bf16.mxu0 0
          %2918 = vmatpush1.bf16.msra.mxu0 %v2730
          %2919 = vmatprep.subr.bf16.mxu0 0
          %2920 = vmatpush1.bf16.msra.mxu0 %v2729
          %2921 = vmatprep.subr.bf16.mxu0 0
          %2922 = vmatpush2.bf16.msra.mxu0 %v2744
          %2923 = vmatprep.subr.bf16.mxu0 0
          %2924 = vmatpush2.bf16.msra.mxu0 %v2743
          %2925 = vmatprep.subr.bf16.mxu0 0
          %2926 = vmatpush2.bf16.msra.mxu0 %v2742
          %2927 = vmatprep.subr.bf16.mxu0 0
          %2928 = vmatpush2.bf16.msra.mxu0 %v2741
          %2929 = vmatprep.subr.bf16.mxu0 0
          %2930 = vmatpush2.bf16.msra.mxu0 %v2740
          %2931 = vmatprep.subr.bf16.mxu0 0
          %2932 = vmatpush2.bf16.msra.mxu0 %v2739
          %2933 = vmatprep.subr.bf16.mxu0 0
          %2934 = vmatpush2.bf16.msra.mxu0 %v2738
          %2935 = vmatprep.subr.bf16.mxu0 0
          %2936 = vmatpush2.bf16.msra.mxu0 %v2737
          %2937 = vmatprep.mubr.bf16.mxu0 %v2303
          %2938 = vmatmul.mubr.bf16.gmra.mxu0 %v2302
          %v2939 = vpop.f32.mrf.mxu0
          %v2940 = vadd.f32 %v2900, %v2939
          %v2941 = vpop.f32.mrf.mxu0
          %v2942 = vpop.f32.mrf.mxu0
          %v2943 = vpop.f32.mrf.mxu0
          %2944 = vdwg.mxu0
          %2945 = vmatprep.subr.bf16.mxu0 0
          %2946 = vmatpush1.bf16.msra.mxu0 %v2752
          %2947 = vmatprep.subr.bf16.mxu0 0
          %2948 = vmatpush1.bf16.msra.mxu0 %v2751
          %2949 = vmatprep.subr.bf16.mxu0 0
          %2950 = vmatpush1.bf16.msra.mxu0 %v2750
          %2951 = vmatprep.subr.bf16.mxu0 0
          %2952 = vmatpush1.bf16.msra.mxu0 %v2749
          %2953 = vmatprep.subr.bf16.mxu0 0
          %2954 = vmatpush1.bf16.msra.mxu0 %v2748
          %2955 = vmatprep.subr.bf16.mxu0 0
          %2956 = vmatpush1.bf16.msra.mxu0 %v2747
          %2957 = vmatprep.subr.bf16.mxu0 0
          %2958 = vmatpush1.bf16.msra.mxu0 %v2746
          %2959 = vmatprep.subr.bf16.mxu0 0
          %2960 = vmatpush1.bf16.msra.mxu0 %v2745
          %2961 = vmatprep.subr.bf16.mxu0 0
          %2962 = vmatpush2.bf16.msra.mxu0 %v2760
          %2963 = vmatprep.subr.bf16.mxu0 0
          %2964 = vmatpush2.bf16.msra.mxu0 %v2759
          %2965 = vmatprep.subr.bf16.mxu0 0
          %2966 = vmatpush2.bf16.msra.mxu0 %v2758
          %2967 = vmatprep.subr.bf16.mxu0 0
          %2968 = vmatpush2.bf16.msra.mxu0 %v2757
          %2969 = vmatprep.subr.bf16.mxu0 0
          %2970 = vmatpush2.bf16.msra.mxu0 %v2756
          %2971 = vmatprep.subr.bf16.mxu0 0
          %2972 = vmatpush2.bf16.msra.mxu0 %v2755
          %2973 = vmatprep.subr.bf16.mxu0 0
          %2974 = vmatpush2.bf16.msra.mxu0 %v2754
          %2975 = vmatprep.subr.bf16.mxu0 0
          %2976 = vmatpush2.bf16.msra.mxu0 %v2753
          %2977 = vmatprep.mubr.bf16.mxu0 %v2305
          %2978 = vmatmul.mubr.bf16.gmra.mxu0 %v2304
          %v2979 = vpop.f32.mrf.mxu0
          %v2980 = vadd.f32 %v2940, %v2979
          %v2981 = vpop.f32.mrf.mxu0
          %v2982 = vpop.f32.mrf.mxu0
          %v2983 = vpop.f32.mrf.mxu0
          %2984 = vdwg.mxu0
          %2985 = vst [vmem:[#allocation12] sm:$0xff] %v2980
        $region68: #{tpu_custom_call.1} parent=39 // pred_fallthru
          _
        // Predicated region
        $region69: #{tpu_custom_call.1} parent=39 // pred_check
          %p2986 = pneg %p152
        $region70: #{tpu_custom_call.1} parent=39 // pred_check_branch
          %2988 = sbr.rel (%p2986) target = $region72
        $region71: #{tpu_custom_call.1} parent=39 // pred_region
          %s2990 = ssub.s32 128, 128
          %2991 = vsyncadd [#allocation5], %s2990
          %s2993 = sshll.u32 [#allocation12], 4
          %s2994 = int_to_ptr.vmem [resolvable:$true] %s2993
          %2996 = dma.vmem_to_hbm [thread:$0]  %s2994, 128, %s5, [#allocation5]
        $region72: #{tpu_custom_call.1} parent=39 // pred_fallthru
          _
        // Predicated region
        $region73: #{tpu_custom_call.1} parent=39 // pred_check
          %p2997 = pneg %p152
        $region74: #{tpu_custom_call.1} parent=39 // pred_check_branch
          %2999 = sbr.rel (%p2997) target = $region76
        $region75: #{tpu_custom_call.1} parent=39 // pred_region
          %3000 = dma.done [#allocation5], 128
        $region76: #{tpu_custom_call.1} parent=39 // pred_fallthru
          _
      $region40: #{tpu_custom_call.1} parent=5 // pred_fallthru
        _
      %p3001 = scmp.le.s32.totalorder 2, %s19
      // Predicated region
      $region77: #{tpu_custom_call.1} parent=5 // pred_check
        %p3002 = pneg %p3001
      $region78: #{tpu_custom_call.1} parent=5 // pred_check_branch
        %3004 = sbr.rel (%p3002) target = $region80
      $region79: #{tpu_custom_call.1} parent=5 // pred_region
        %s3005 = ssub.s32 %s19, 2
      $region80: #{tpu_custom_call.1} parent=5 // pred_fallthru
        _
    $region6: #{tpu_custom_call.1} parent=1 // loop_footer
      %s23 = sadd.s32 1, %s19
    $region7: #{tpu_custom_call.1} parent=1 // loop_footer_branch
      %18 = sbr.rel target = $region3
    $region8: #{tpu_custom_call.1} parent=1 // loop_exit
      _
    %3006 = vsyncpa [#allocation4], 1
    %s3007 = scalar_lea.sflag [#allocation4], 1
    %3008 = vsyncpa %s3007, 1
    %3009 = vsyncpa [#allocation7], 1
    %s3010 = scalar_lea.sflag [#allocation7], 1
    %3011 = vsyncpa %s3010, 1
    %3012 = vsyncpa [#allocation10], 1
    %3013 = vsyncpa [#allocation5], 1
    %s3014 = scalar_lea.sflag [#allocation5], 1
    %3015 = vsyncpa %s3014, 1

</llo_original>
